<compile_context>
chip_gen: v5e
topology: v5e:2x2
jax: 0.10.0
libtpu: 0.0.40
codegen_flags: <defaults>
</compile_context>

<pallas_src>
import jax
import jax.numpy as jnp
from jax.experimental import pallas as pl
from jax.experimental.pallas import tpu as pltpu

# ---- small, forward-consistent shapes ----
B, N, C, H, W = 2, 4, 3, 32, 32          # (batch, n tiles, RGB, spatial)
KH = KW = 3
STRIDE = 2
OH = (H + 2 - KH) // STRIDE + 1          # 16
OW = (W + 2 - KW) // STRIDE + 1          # 16
NHW = N * OH * OW                        # 1024 rows per batch element
R = B * NHW                              # 2048 rows total (batches stacked)
NC = 128                                 # backbone num_features (stand-in for 1280)
HID = 512                                # head hidden dim (as in the module)
KRAW = C * KH * KW                       # 27
KPAD = 32                                # pad im2col K-dim for a clean VMEM tile

# Static VMEM budget (documented, not tuned): patches lane-pad to 128 lanes in
# VMEM (0.5 MiB) + w1 (128 KiB) + cw/consts (16 KiB) + in-kernel f32 feat
# intermediate (2048x128 = 1 MiB)  < 2 MiB, far under the 32 MiB default scoped
# limit and v7x's 64 MiB physical VMEM -> no vmem_limit_bytes / blocking needed.
_VMEM_BYTES = (R * 128 * 2) + (KPAD * NC * 2) + (NC * HID * 2) + (4 * HID * 4) + (R * NC * 4)
assert _VMEM_BYTES < 16 * 1024 * 1024, _VMEM_BYTES


def _make_params(key):
    k = jax.random.split(key, 6)
    cw = jax.random.normal(k[0], (NC, C, KH, KW), jnp.float32) * ((C * KH * KW) ** -0.5)
    cb = jax.random.normal(k[1], (NC,), jnp.float32) * 0.01
    w1 = jax.random.normal(k[2], (NC, HID), jnp.float32) * (NC ** -0.5)   # Linear(nc, 512)
    b1 = jax.random.normal(k[3], (HID,), jnp.float32) * 0.01
    w2 = jax.random.normal(k[4], (HID, 1), jnp.float32) * (HID ** -0.5)   # Linear(512, 1)
    b2 = jax.random.normal(k[5], (1,), jnp.float32) * 0.01
    return cw, cb, w1, b1, w2, b2


def prepare_params(params):
    """One-time parameter preprocessing, hoisted out of the per-call path.

    Returns kernel-ready operands:
      cw_mat: (KPAD, NC) bf16  flattened (c,kh,kw)-major, zero-padded conv weight
      w1_bf : (NC, HID)  bf16  head Linear(nc, 512) weight
      consts: (4, HID)   f32   rows = [conv bias | 0, b1, w2[:, 0], b2 | 0]
    """
    cw, cb, w1, b1, w2, b2 = params
    cw_mat = jnp.pad(cw.reshape(NC, KRAW).T,
                     ((0, KPAD - KRAW), (0, 0))).astype(jnp.bfloat16)       # (KPAD, NC)
    w1_bf = w1.astype(jnp.bfloat16)                                         # (NC, HID)
    consts = jnp.zeros((4, HID), jnp.float32)
    consts = consts.at[0, :NC].set(cb)
    consts = consts.at[1, :].set(b1)
    consts = consts.at[2, :].set(w2[:, 0])
    consts = consts.at[3, 0].set(b2[0])
    return cw_mat, w1_bf, consts


def _im2col(x):
    """(B, N, C, H, W) -> (B*NHW, KPAD) bf16 patches for a 3x3/stride-2/pad-1 conv.

    Column order is (c, kh, kw), matching the flattened OIHW conv weight.  With
    allow_input_fusion this producer may be fused into the pallas_call's patches
    operand; if not, the ~128 KiB bf16 intermediate round trip is accepted.
    """
    xf = x.astype(jnp.bfloat16).reshape(B * N, C, H, W)
    xp = jnp.pad(xf, ((0, 0), (0, 0), (1, 1), (1, 1)))
    cols = []
    for c in range(C):
        for kh in range(KH):
            for kw in range(KW):
                cols.append(xp[:, c, kh:kh + STRIDE * OH:STRIDE, kw:kw + STRIDE * OW:STRIDE])
    patches = jnp.stack(cols, axis=-1)                                      # (B*N, OH, OW, 27)
    patches = jnp.pad(patches, ((0, 0), (0, 0), (0, 0), (0, KPAD - KRAW)))
    return patches.reshape(R, KPAD)                                         # (2048, 32) bf16


def _model_kernel(p_ref, cw_ref, w1_ref, consts_ref, o_ref):
    # p_ref:      (R, KPAD)  bf16  im2col patches, all batches stacked row-wise
    # cw_ref:     (KPAD, NC) bf16  flattened conv-stem weight
    # w1_ref:     (NC, HID)  bf16  head Linear(nc, 512) weight
    # consts_ref: (4, HID)   f32   rows = [cb | 0, b1, w2[:, 0], b2 | 0]
    # o_ref:      (B, 1)     f32
    # backbone stand-in: conv stem (bf16 MXU matmul, f32 accumulation) + bias + ReLU
    feat = jnp.dot(p_ref[...], cw_ref[...], preferred_element_type=jnp.float32)   # (R, NC) f32
    feat = jnp.maximum(feat + consts_ref[0:1, 0:NC], 0.0)
    # view/permute/view + AdaptiveAvgPool2d(1) + Flatten == per-batch mean over (n, h, w).
    # (R, NC) -> (B, NHW, NC) is a free reshape (NHW=1024 is (8,128)-aligned); the mean is a
    # sublane reduction -- no per-batch concat / vreg relayout.
    pooled = jnp.mean(feat.reshape(B, NHW, NC), axis=1)                            # (B, NC) f32
    # head: Linear(nc, 512) -> ReLU -> Dropout(0.5)=identity (inference) -> Linear(512, 1)
    h = jnp.dot(pooled.astype(jnp.bfloat16), w1_ref[...],
                preferred_element_type=jnp.float32) + consts_ref[1:2, :]           # (B, HID)
    h = jnp.maximum(h, 0.0)
    y = jnp.sum(h * consts_ref[2:3, :], axis=-1, keepdims=True) + consts_ref[3:4, 0:1]
    o_ref[...] = y                                                                 # (B, 1)


def _forward_impl(x, cw_mat, w1_bf, consts):
    """Per-call path: only x-dependent work (im2col) + one grid-less pallas_call."""
    patches = _im2col(x)                                                           # (R, KPAD) bf16
    y = pl.pallas_call(
        _model_kernel,
        out_shape=jax.ShapeDtypeStruct((B, 1), jnp.float32),
        in_specs=[pl.BlockSpec(memory_space=pltpu.MemorySpace.VMEM)] * 4,
        out_specs=pl.BlockSpec(memory_space=pltpu.MemorySpace.VMEM),
        compiler_params=pltpu.CompilerParams(
            # hint: fuse the im2col producer into the patches operand (best effort)
            allow_input_fusion=[True, False, False, False]),
    )(patches, cw_mat, w1_bf, consts)
    return y                                                                       # (B, 1)


model_iafoss_forward = jax.jit(_forward_impl)


def _reference(x, params):
    """Pure-JAX reference mirroring the PyTorch forward (same stand-in backbone,
    same bf16 operand quantization as the kernel, f32 math)."""
    cw, cb, w1, b1, w2, b2 = params
    xq = x.astype(jnp.bfloat16).astype(jnp.float32).reshape(B * N, C, H, W)
    cwq = cw.astype(jnp.bfloat16).astype(jnp.float32)
    feat = jax.lax.conv_general_dilated(
        xq, cwq, window_strides=(STRIDE, STRIDE), padding=((1, 1), (1, 1)),
        dimension_numbers=("NCHW", "OIHW", "NCHW"))
    feat = jnp.maximum(feat + cb.reshape(1, NC, 1, 1), 0.0)               # (B*N, NC, OH, OW)
    # input1.view(-1, n, c, h, w).permute(0,2,1,3,4).view(-1, c, h*n, w)
    f = feat.reshape(B, N, NC, OH, OW).transpose(0, 2, 1, 3, 4).reshape(B, NC, N * OH, OW)
    pooled = f.mean(axis=(2, 3))                                          # AdaptiveAvgPool2d(1)+Flatten
    pooledq = pooled.astype(jnp.bfloat16).astype(jnp.float32)
    w1q = w1.astype(jnp.bfloat16).astype(jnp.float32)
    h = jnp.maximum(pooledq @ w1q + b1, 0.0)
    return h @ w2 + b2                                                    # (B, 1)


if __name__ == "__main__":
    key = jax.random.PRNGKey(0)
    kx, kp = jax.random.split(key)
    x = jax.random.normal(kx, (B, N, C, H, W), jnp.float32)
    params = _make_params(kp)

    # One-time parameter preprocessing (outside the per-forward path).
    cw_mat, w1_bf, consts = jax.block_until_ready(prepare_params(params))

    y = jax.block_until_ready(model_iafoss_forward(x, cw_mat, w1_bf, consts))
    y_ref = _reference(x, params)

    assert y.shape == (B, 1), y.shape
    assert jnp.allclose(y, y_ref, rtol=1e-3, atol=1e-3), (y, y_ref)
    print("KERNEL_OK")
</pallas_src>

<mosaic_0001>
module attributes {stable_mosaic.version = 11 : i64} {
  func.func @_model_kernel(%arg0: memref<2048x32xbf16, #tpu.memory_space<vmem>>, %arg1: memref<32x128xbf16, #tpu.memory_space<vmem>>, %arg2: memref<128x512xbf16, #tpu.memory_space<vmem>>, %arg3: memref<4x512xf32, #tpu.memory_space<vmem>>, %arg4: memref<2x1xf32, #tpu.memory_space<vmem>>) attributes {dimension_semantics = [], scalar_prefetch = 0 : i64, scratch_operands = 0 : i64, tpu.core_type = #tpu.core_type<tc>} {
    %c0 = arith.constant 0 : index
    %c0_0 = arith.constant 0 : index
    %0 = vector.load %arg0[%c0, %c0_0] : memref<2048x32xbf16, #tpu.memory_space<vmem>>, vector<2048x32xbf16>
    %c0_1 = arith.constant 0 : index
    %c0_2 = arith.constant 0 : index
    %1 = vector.load %arg1[%c0_1, %c0_2] : memref<32x128xbf16, #tpu.memory_space<vmem>>, vector<32x128xbf16>
    %cst = arith.constant dense<0.000000e+00> : vector<2048x128xf32>
    %2 = tpu.matmul %0, %1, %cst {dimension_numbers = #tpu.dot_dimension_numbers<[1], [0], [0], [1], [0, 0, 1, 1], [], []>} : vector<2048x32xbf16>, vector<32x128xbf16>, vector<2048x128xf32> -> vector<2048x128xf32>
    %c0_3 = arith.constant 0 : index
    %c0_4 = arith.constant 0 : index
    %3 = vector.load %arg3[%c0_3, %c0_4] : memref<4x512xf32, #tpu.memory_space<vmem>>, vector<1x128xf32>
    %4 = vector.broadcast %3 : vector<1x128xf32> to vector<2048x128xf32>
    %5 = arith.addf %2, %4 : vector<2048x128xf32>
    %cst_5 = arith.constant 0.000000e+00 : f32
    %6 = vector.broadcast %cst_5 : f32 to vector<2048x128xf32>
    %7 = arith.maximumf %5, %6 : vector<2048x128xf32>
    %8 = vector.shape_cast %7 : vector<2048x128xf32> to vector<2x1024x128xf32>
    %cst_6 = arith.constant dense<0.000000e+00> : vector<2x128xf32>
    %9 = vector.multi_reduction <add>, %8, %cst_6 [1] : vector<2x1024x128xf32> to vector<2x128xf32>
    %cst_7 = arith.constant 1.024000e+03 : f32
    %10 = vector.broadcast %cst_7 : f32 to vector<2x128xf32>
    %11 = arith.divf %9, %10 : vector<2x128xf32>
    %12 = arith.truncf %11 : vector<2x128xf32> to vector<2x128xbf16>
    %c0_8 = arith.constant 0 : index
    %c0_9 = arith.constant 0 : index
    %13 = vector.load %arg2[%c0_8, %c0_9] : memref<128x512xbf16, #tpu.memory_space<vmem>>, vector<128x512xbf16>
    %cst_10 = arith.constant dense<0.000000e+00> : vector<2x512xf32>
    %14 = tpu.matmul %12, %13, %cst_10 {dimension_numbers = #tpu.dot_dimension_numbers<[1], [0], [0], [1], [0, 0, 1, 1], [], []>} : vector<2x128xbf16>, vector<128x512xbf16>, vector<2x512xf32> -> vector<2x512xf32>
    %c1 = arith.constant 1 : index
    %c0_11 = arith.constant 0 : index
    %15 = vector.load %arg3[%c1, %c0_11] : memref<4x512xf32, #tpu.memory_space<vmem>>, vector<1x512xf32>
    %16 = vector.broadcast %15 : vector<1x512xf32> to vector<2x512xf32>
    %17 = arith.addf %14, %16 : vector<2x512xf32>
    %cst_12 = arith.constant 0.000000e+00 : f32
    %18 = vector.broadcast %cst_12 : f32 to vector<2x512xf32>
    %19 = arith.maximumf %17, %18 : vector<2x512xf32>
    %c2 = arith.constant 2 : index
    %c0_13 = arith.constant 0 : index
    %20 = vector.load %arg3[%c2, %c0_13] : memref<4x512xf32, #tpu.memory_space<vmem>>, vector<1x512xf32>
    %21 = vector.broadcast %20 : vector<1x512xf32> to vector<2x512xf32>
    %22 = arith.mulf %19, %21 : vector<2x512xf32>
    %cst_14 = arith.constant dense<0.000000e+00> : vector<2xf32>
    %23 = vector.multi_reduction <add>, %22, %cst_14 [1] : vector<2x512xf32> to vector<2xf32>
    %24 = vector.shape_cast %23 : vector<2xf32> to vector<2x1xf32>
    %c3 = arith.constant 3 : index
    %c0_15 = arith.constant 0 : index
    %25 = vector.load %arg3[%c3, %c0_15] : memref<4x512xf32, #tpu.memory_space<vmem>>, vector<1x1xf32>
    %26 = vector.broadcast %25 : vector<1x1xf32> to vector<2x1xf32>
    %27 = arith.addf %24, %26 : vector<2x1xf32>
    %c0_16 = arith.constant 0 : index
    %c0_17 = arith.constant 0 : index
    %28 = vector.load %arg4[%c0_16, %c0_17] : memref<2x1xf32, #tpu.memory_space<vmem>>, vector<2x1xf32>
    tpu.vector_store %arg4[%c0_16, %c0_17], %27 {strides = array<i32>} : memref<2x1xf32, #tpu.memory_space<vmem>>, vector<2x1xf32>,
    return
  }
}

</mosaic_0001>

<llo_original>
// kernel: _forward_impl.1
$region0: #{_forward_impl.1}
  #allocation0 [shape = 'u32[]', space=smem, size = 0x4, offset = 0x4, fixed_abs, tag = 'smem constant byte address 0x4 - core index']
  #allocation1 [shape = 'u32[72,128]{1,0:T(1,128)}', space=vmem, size = 0x9000, scoped, tag = 'internal scratch']
  %s0 = inlined_call_operand.vmem [shape: bf16[2048,32], index: 0, kind: input, shape index: {}]
  %s1 = inlined_call_operand.vmem [shape: bf16[32,128], index: 1, kind: input, shape index: {}]
  %s2 = inlined_call_operand.vmem [shape: bf16[128,512], index: 2, kind: input, shape index: {}]
  %s3 = inlined_call_operand.vmem [shape: f32[4,512], index: 3, kind: input, shape index: {}]
  %s4 = inlined_call_operand.vmem [shape: f32[2,1], index: 4, kind: output, shape index: {}]
  %s5 = sld [smem:[#allocation0]]
  $region26: #{_forward_impl.1} parent=0
    _
  %s7 = ssub.s32 1, %s5
  %s8 = scalar_select 0, %s7, %s5
  // Predicated region
  $region2: #{_forward_impl.1} parent=0 // pred_check
    _
  $region3: #{_forward_impl.1} parent=0 // pred_check_branch
    %10 = sbr.rel (0) target = $region5
  $region4: #{_forward_impl.1} parent=0 // pred_region
    _
  $region5: #{_forward_impl.1} parent=0 // pred_fallthru
    _
  // Predicated region
  $region6: #{_forward_impl.1} parent=0 // pred_check
    _
  $region7: #{_forward_impl.1} parent=0 // pred_check_branch
    %12 = sbr.rel (0) target = $region9
  $region8: #{_forward_impl.1} parent=0 // pred_region
    _
  $region9: #{_forward_impl.1} parent=0 // pred_fallthru
    _
  // Predicated region
  $region10: #{_forward_impl.1} parent=0 // pred_check
    _
  $region11: #{_forward_impl.1} parent=0 // pred_check_branch
    %14 = sbr.rel (0) target = $region13
  $region12: #{_forward_impl.1} parent=0 // pred_region
    _
  $region13: #{_forward_impl.1} parent=0 // pred_fallthru
    _
  // Predicated region
  $region14: #{_forward_impl.1} parent=0 // pred_check
    _
  $region15: #{_forward_impl.1} parent=0 // pred_check_branch
    %16 = sbr.rel (0) target = $region17
  $region16: #{_forward_impl.1} parent=0 // pred_region
    _
  $region17: #{_forward_impl.1} parent=0 // pred_fallthru
    _
  %v18 = vld [vmem:[%s0] sm:$0xf]
  %v19 = vld [vmem:[%s0 + $0x4] sm:$0xf]
  %v20 = vld [vmem:[%s0 + $0x8] sm:$0xf]
  %v21 = vld [vmem:[%s0 + $0xc] sm:$0xf]
  %v22 = vld [vmem:[%s0 + $0x10] sm:$0xf]
  %v23 = vld [vmem:[%s0 + $0x14] sm:$0xf]
  %v24 = vld [vmem:[%s0 + $0x18] sm:$0xf]
  %v25 = vld [vmem:[%s0 + $0x1c] sm:$0xf]
  %v26 = vld [vmem:[%s0 + $0x20] sm:$0xf]
  %v27 = vld [vmem:[%s0 + $0x24] sm:$0xf]
  %v28 = vld [vmem:[%s0 + $0x28] sm:$0xf]
  %v29 = vld [vmem:[%s0 + $0x2c] sm:$0xf]
  %v30 = vld [vmem:[%s0 + $0x30] sm:$0xf]
  %v31 = vld [vmem:[%s0 + $0x34] sm:$0xf]
  %v32 = vld [vmem:[%s0 + $0x38] sm:$0xf]
  %v33 = vld [vmem:[%s0 + $0x3c] sm:$0xf]
  %v34 = vld [vmem:[%s0 + $0x40] sm:$0xf]
  %v35 = vld [vmem:[%s0 + $0x44] sm:$0xf]
  %v36 = vld [vmem:[%s0 + $0x48] sm:$0xf]
  %v37 = vld [vmem:[%s0 + $0x4c] sm:$0xf]
  %v38 = vld [vmem:[%s0 + $0x50] sm:$0xf]
  %v39 = vld [vmem:[%s0 + $0x54] sm:$0xf]
  %v40 = vld [vmem:[%s0 + $0x58] sm:$0xf]
  %v41 = vld [vmem:[%s0 + $0x5c] sm:$0xf]
  %v42 = vld [vmem:[%s0 + $0x60] sm:$0xf]
  %v43 = vld [vmem:[%s0 + $0x64] sm:$0xf]
  %v44 = vld [vmem:[%s0 + $0x68] sm:$0xf]
  %v45 = vld [vmem:[%s0 + $0x6c] sm:$0xf]
  %v46 = vld [vmem:[%s0 + $0x70] sm:$0xf]
  %v47 = vld [vmem:[%s0 + $0x74] sm:$0xf]
  %v48 = vld [vmem:[%s0 + $0x78] sm:$0xf]
  %v49 = vld [vmem:[%s0 + $0x7c] sm:$0xf]
  %v50 = vld [vmem:[%s0 + $0x80] sm:$0xf]
  %v51 = vld [vmem:[%s0 + $0x84] sm:$0xf]
  %v52 = vld [vmem:[%s0 + $0x88] sm:$0xf]
  %v53 = vld [vmem:[%s0 + $0x8c] sm:$0xf]
  %v54 = vld [vmem:[%s0 + $0x90] sm:$0xf]
  %v55 = vld [vmem:[%s0 + $0x94] sm:$0xf]
  %v56 = vld [vmem:[%s0 + $0x98] sm:$0xf]
  %v57 = vld [vmem:[%s0 + $0x9c] sm:$0xf]
  %v58 = vld [vmem:[%s0 + $0xa0] sm:$0xf]
  %v59 = vld [vmem:[%s0 + $0xa4] sm:$0xf]
  %v60 = vld [vmem:[%s0 + $0xa8] sm:$0xf]
  %v61 = vld [vmem:[%s0 + $0xac] sm:$0xf]
  %v62 = vld [vmem:[%s0 + $0xb0] sm:$0xf]
  %v63 = vld [vmem:[%s0 + $0xb4] sm:$0xf]
  %v64 = vld [vmem:[%s0 + $0xb8] sm:$0xf]
  %v65 = vld [vmem:[%s0 + $0xbc] sm:$0xf]
  %v66 = vld [vmem:[%s0 + $0xc0] sm:$0xf]
  %v67 = vld [vmem:[%s0 + $0xc4] sm:$0xf]
  %v68 = vld [vmem:[%s0 + $0xc8] sm:$0xf]
  %v69 = vld [vmem:[%s0 + $0xcc] sm:$0xf]
  %v70 = vld [vmem:[%s0 + $0xd0] sm:$0xf]
  %v71 = vld [vmem:[%s0 + $0xd4] sm:$0xf]
  %v72 = vld [vmem:[%s0 + $0xd8] sm:$0xf]
  %v73 = vld [vmem:[%s0 + $0xdc] sm:$0xf]
  %v74 = vld [vmem:[%s0 + $0xe0] sm:$0xf]
  %v75 = vld [vmem:[%s0 + $0xe4] sm:$0xf]
  %v76 = vld [vmem:[%s0 + $0xe8] sm:$0xf]
  %v77 = vld [vmem:[%s0 + $0xec] sm:$0xf]
  %v78 = vld [vmem:[%s0 + $0xf0] sm:$0xf]
  %v79 = vld [vmem:[%s0 + $0xf4] sm:$0xf]
  %v80 = vld [vmem:[%s0 + $0xf8] sm:$0xf]
  %v81 = vld [vmem:[%s0 + $0xfc] sm:$0xf]
  %v82 = vld [vmem:[%s0 + $0x100] sm:$0xf]
  %v83 = vld [vmem:[%s0 + $0x104] sm:$0xf]
  %v84 = vld [vmem:[%s0 + $0x108] sm:$0xf]
  %v85 = vld [vmem:[%s0 + $0x10c] sm:$0xf]
  %v86 = vld [vmem:[%s0 + $0x110] sm:$0xf]
  %v87 = vld [vmem:[%s0 + $0x114] sm:$0xf]
  %v88 = vld [vmem:[%s0 + $0x118] sm:$0xf]
  %v89 = vld [vmem:[%s0 + $0x11c] sm:$0xf]
  %v90 = vld [vmem:[%s0 + $0x120] sm:$0xf]
  %v91 = vld [vmem:[%s0 + $0x124] sm:$0xf]
  %v92 = vld [vmem:[%s0 + $0x128] sm:$0xf]
  %v93 = vld [vmem:[%s0 + $0x12c] sm:$0xf]
  %v94 = vld [vmem:[%s0 + $0x130] sm:$0xf]
  %v95 = vld [vmem:[%s0 + $0x134] sm:$0xf]
  %v96 = vld [vmem:[%s0 + $0x138] sm:$0xf]
  %v97 = vld [vmem:[%s0 + $0x13c] sm:$0xf]
  %v98 = vld [vmem:[%s0 + $0x140] sm:$0xf]
  %v99 = vld [vmem:[%s0 + $0x144] sm:$0xf]
  %v100 = vld [vmem:[%s0 + $0x148] sm:$0xf]
  %v101 = vld [vmem:[%s0 + $0x14c] sm:$0xf]
  %v102 = vld [vmem:[%s0 + $0x150] sm:$0xf]
  %v103 = vld [vmem:[%s0 + $0x154] sm:$0xf]
  %v104 = vld [vmem:[%s0 + $0x158] sm:$0xf]
  %v105 = vld [vmem:[%s0 + $0x15c] sm:$0xf]
  %v106 = vld [vmem:[%s0 + $0x160] sm:$0xf]
  %v107 = vld [vmem:[%s0 + $0x164] sm:$0xf]
  %v108 = vld [vmem:[%s0 + $0x168] sm:$0xf]
  %v109 = vld [vmem:[%s0 + $0x16c] sm:$0xf]
  %v110 = vld [vmem:[%s0 + $0x170] sm:$0xf]
  %v111 = vld [vmem:[%s0 + $0x174] sm:$0xf]
  %v112 = vld [vmem:[%s0 + $0x178] sm:$0xf]
  %v113 = vld [vmem:[%s0 + $0x17c] sm:$0xf]
  %v114 = vld [vmem:[%s0 + $0x180] sm:$0xf]
  %v115 = vld [vmem:[%s0 + $0x184] sm:$0xf]
  %v116 = vld [vmem:[%s0 + $0x188] sm:$0xf]
  %v117 = vld [vmem:[%s0 + $0x18c] sm:$0xf]
  %v118 = vld [vmem:[%s0 + $0x190] sm:$0xf]
  %v119 = vld [vmem:[%s0 + $0x194] sm:$0xf]
  %v120 = vld [vmem:[%s0 + $0x198] sm:$0xf]
  %v121 = vld [vmem:[%s0 + $0x19c] sm:$0xf]
  %v122 = vld [vmem:[%s0 + $0x1a0] sm:$0xf]
  %v123 = vld [vmem:[%s0 + $0x1a4] sm:$0xf]
  %v124 = vld [vmem:[%s0 + $0x1a8] sm:$0xf]
  %v125 = vld [vmem:[%s0 + $0x1ac] sm:$0xf]
  %v126 = vld [vmem:[%s0 + $0x1b0] sm:$0xf]
  %v127 = vld [vmem:[%s0 + $0x1b4] sm:$0xf]
  %v128 = vld [vmem:[%s0 + $0x1b8] sm:$0xf]
  %v129 = vld [vmem:[%s0 + $0x1bc] sm:$0xf]
  %v130 = vld [vmem:[%s0 + $0x1c0] sm:$0xf]
  %v131 = vld [vmem:[%s0 + $0x1c4] sm:$0xf]
  %v132 = vld [vmem:[%s0 + $0x1c8] sm:$0xf]
  %v133 = vld [vmem:[%s0 + $0x1cc] sm:$0xf]
  %v134 = vld [vmem:[%s0 + $0x1d0] sm:$0xf]
  %v135 = vld [vmem:[%s0 + $0x1d4] sm:$0xf]
  %v136 = vld [vmem:[%s0 + $0x1d8] sm:$0xf]
  %v137 = vld [vmem:[%s0 + $0x1dc] sm:$0xf]
  %v138 = vld [vmem:[%s0 + $0x1e0] sm:$0xf]
  %v139 = vld [vmem:[%s0 + $0x1e4] sm:$0xf]
  %v140 = vld [vmem:[%s0 + $0x1e8] sm:$0xf]
  %v141 = vld [vmem:[%s0 + $0x1ec] sm:$0xf]
  %v142 = vld [vmem:[%s0 + $0x1f0] sm:$0xf]
  %v143 = vld [vmem:[%s0 + $0x1f4] sm:$0xf]
  %v144 = vld [vmem:[%s0 + $0x1f8] sm:$0xf]
  %v145 = vld [vmem:[%s0 + $0x1fc] sm:$0xf]
  %v146 = vld [vmem:[%s0 + $0x200] sm:$0xf]
  %v147 = vld [vmem:[%s0 + $0x204] sm:$0xf]
  %v148 = vld [vmem:[%s0 + $0x208] sm:$0xf]
  %v149 = vld [vmem:[%s0 + $0x20c] sm:$0xf]
  %v150 = vld [vmem:[%s0 + $0x210] sm:$0xf]
  %v151 = vld [vmem:[%s0 + $0x214] sm:$0xf]
  %v152 = vld [vmem:[%s0 + $0x218] sm:$0xf]
  %v153 = vld [vmem:[%s0 + $0x21c] sm:$0xf]
  %v154 = vld [vmem:[%s0 + $0x220] sm:$0xf]
  %v155 = vld [vmem:[%s0 + $0x224] sm:$0xf]
  %v156 = vld [vmem:[%s0 + $0x228] sm:$0xf]
  %v157 = vld [vmem:[%s0 + $0x22c] sm:$0xf]
  %v158 = vld [vmem:[%s0 + $0x230] sm:$0xf]
  %v159 = vld [vmem:[%s0 + $0x234] sm:$0xf]
  %v160 = vld [vmem:[%s0 + $0x238] sm:$0xf]
  %v161 = vld [vmem:[%s0 + $0x23c] sm:$0xf]
  %v162 = vld [vmem:[%s0 + $0x240] sm:$0xf]
  %v163 = vld [vmem:[%s0 + $0x244] sm:$0xf]
  %v164 = vld [vmem:[%s0 + $0x248] sm:$0xf]
  %v165 = vld [vmem:[%s0 + $0x24c] sm:$0xf]
  %v166 = vld [vmem:[%s0 + $0x250] sm:$0xf]
  %v167 = vld [vmem:[%s0 + $0x254] sm:$0xf]
  %v168 = vld [vmem:[%s0 + $0x258] sm:$0xf]
  %v169 = vld [vmem:[%s0 + $0x25c] sm:$0xf]
  %v170 = vld [vmem:[%s0 + $0x260] sm:$0xf]
  %v171 = vld [vmem:[%s0 + $0x264] sm:$0xf]
  %v172 = vld [vmem:[%s0 + $0x268] sm:$0xf]
  %v173 = vld [vmem:[%s0 + $0x26c] sm:$0xf]
  %v174 = vld [vmem:[%s0 + $0x270] sm:$0xf]
  %v175 = vld [vmem:[%s0 + $0x274] sm:$0xf]
  %v176 = vld [vmem:[%s0 + $0x278] sm:$0xf]
  %v177 = vld [vmem:[%s0 + $0x27c] sm:$0xf]
  %v178 = vld [vmem:[%s0 + $0x280] sm:$0xf]
  %v179 = vld [vmem:[%s0 + $0x284] sm:$0xf]
  %v180 = vld [vmem:[%s0 + $0x288] sm:$0xf]
  %v181 = vld [vmem:[%s0 + $0x28c] sm:$0xf]
  %v182 = vld [vmem:[%s0 + $0x290] sm:$0xf]
  %v183 = vld [vmem:[%s0 + $0x294] sm:$0xf]
  %v184 = vld [vmem:[%s0 + $0x298] sm:$0xf]
  %v185 = vld [vmem:[%s0 + $0x29c] sm:$0xf]
  %v186 = vld [vmem:[%s0 + $0x2a0] sm:$0xf]
  %v187 = vld [vmem:[%s0 + $0x2a4] sm:$0xf]
  %v188 = vld [vmem:[%s0 + $0x2a8] sm:$0xf]
  %v189 = vld [vmem:[%s0 + $0x2ac] sm:$0xf]
  %v190 = vld [vmem:[%s0 + $0x2b0] sm:$0xf]
  %v191 = vld [vmem:[%s0 + $0x2b4] sm:$0xf]
  %v192 = vld [vmem:[%s0 + $0x2b8] sm:$0xf]
  %v193 = vld [vmem:[%s0 + $0x2bc] sm:$0xf]
  %v194 = vld [vmem:[%s0 + $0x2c0] sm:$0xf]
  %v195 = vld [vmem:[%s0 + $0x2c4] sm:$0xf]
  %v196 = vld [vmem:[%s0 + $0x2c8] sm:$0xf]
  %v197 = vld [vmem:[%s0 + $0x2cc] sm:$0xf]
  %v198 = vld [vmem:[%s0 + $0x2d0] sm:$0xf]
  %v199 = vld [vmem:[%s0 + $0x2d4] sm:$0xf]
  %v200 = vld [vmem:[%s0 + $0x2d8] sm:$0xf]
  %v201 = vld [vmem:[%s0 + $0x2dc] sm:$0xf]
  %v202 = vld [vmem:[%s0 + $0x2e0] sm:$0xf]
  %v203 = vld [vmem:[%s0 + $0x2e4] sm:$0xf]
  %v204 = vld [vmem:[%s0 + $0x2e8] sm:$0xf]
  %v205 = vld [vmem:[%s0 + $0x2ec] sm:$0xf]
  %v206 = vld [vmem:[%s0 + $0x2f0] sm:$0xf]
  %v207 = vld [vmem:[%s0 + $0x2f4] sm:$0xf]
  %v208 = vld [vmem:[%s0 + $0x2f8] sm:$0xf]
  %v209 = vld [vmem:[%s0 + $0x2fc] sm:$0xf]
  %v210 = vld [vmem:[%s0 + $0x300] sm:$0xf]
  %v211 = vld [vmem:[%s0 + $0x304] sm:$0xf]
  %v212 = vld [vmem:[%s0 + $0x308] sm:$0xf]
  %v213 = vld [vmem:[%s0 + $0x30c] sm:$0xf]
  %v214 = vld [vmem:[%s0 + $0x310] sm:$0xf]
  %v215 = vld [vmem:[%s0 + $0x314] sm:$0xf]
  %v216 = vld [vmem:[%s0 + $0x318] sm:$0xf]
  %v217 = vld [vmem:[%s0 + $0x31c] sm:$0xf]
  %v218 = vld [vmem:[%s0 + $0x320] sm:$0xf]
  %v219 = vld [vmem:[%s0 + $0x324] sm:$0xf]
  %v220 = vld [vmem:[%s0 + $0x328] sm:$0xf]
  %v221 = vld [vmem:[%s0 + $0x32c] sm:$0xf]
  %v222 = vld [vmem:[%s0 + $0x330] sm:$0xf]
  %v223 = vld [vmem:[%s0 + $0x334] sm:$0xf]
  %v224 = vld [vmem:[%s0 + $0x338] sm:$0xf]
  %v225 = vld [vmem:[%s0 + $0x33c] sm:$0xf]
  %v226 = vld [vmem:[%s0 + $0x340] sm:$0xf]
  %v227 = vld [vmem:[%s0 + $0x344] sm:$0xf]
  %v228 = vld [vmem:[%s0 + $0x348] sm:$0xf]
  %v229 = vld [vmem:[%s0 + $0x34c] sm:$0xf]
  %v230 = vld [vmem:[%s0 + $0x350] sm:$0xf]
  %v231 = vld [vmem:[%s0 + $0x354] sm:$0xf]
  %v232 = vld [vmem:[%s0 + $0x358] sm:$0xf]
  %v233 = vld [vmem:[%s0 + $0x35c] sm:$0xf]
  %v234 = vld [vmem:[%s0 + $0x360] sm:$0xf]
  %v235 = vld [vmem:[%s0 + $0x364] sm:$0xf]
  %v236 = vld [vmem:[%s0 + $0x368] sm:$0xf]
  %v237 = vld [vmem:[%s0 + $0x36c] sm:$0xf]
  %v238 = vld [vmem:[%s0 + $0x370] sm:$0xf]
  %v239 = vld [vmem:[%s0 + $0x374] sm:$0xf]
  %v240 = vld [vmem:[%s0 + $0x378] sm:$0xf]
  %v241 = vld [vmem:[%s0 + $0x37c] sm:$0xf]
  %v242 = vld [vmem:[%s0 + $0x380] sm:$0xf]
  %v243 = vld [vmem:[%s0 + $0x384] sm:$0xf]
  %v244 = vld [vmem:[%s0 + $0x388] sm:$0xf]
  %v245 = vld [vmem:[%s0 + $0x38c] sm:$0xf]
  %v246 = vld [vmem:[%s0 + $0x390] sm:$0xf]
  %v247 = vld [vmem:[%s0 + $0x394] sm:$0xf]
  %v248 = vld [vmem:[%s0 + $0x398] sm:$0xf]
  %v249 = vld [vmem:[%s0 + $0x39c] sm:$0xf]
  %v250 = vld [vmem:[%s0 + $0x3a0] sm:$0xf]
  %v251 = vld [vmem:[%s0 + $0x3a4] sm:$0xf]
  %v252 = vld [vmem:[%s0 + $0x3a8] sm:$0xf]
  %v253 = vld [vmem:[%s0 + $0x3ac] sm:$0xf]
  %v254 = vld [vmem:[%s0 + $0x3b0] sm:$0xf]
  %v255 = vld [vmem:[%s0 + $0x3b4] sm:$0xf]
  %v256 = vld [vmem:[%s0 + $0x3b8] sm:$0xf]
  %v257 = vld [vmem:[%s0 + $0x3bc] sm:$0xf]
  %v258 = vld [vmem:[%s0 + $0x3c0] sm:$0xf]
  %v259 = vld [vmem:[%s0 + $0x3c4] sm:$0xf]
  %v260 = vld [vmem:[%s0 + $0x3c8] sm:$0xf]
  %v261 = vld [vmem:[%s0 + $0x3cc] sm:$0xf]
  %v262 = vld [vmem:[%s0 + $0x3d0] sm:$0xf]
  %v263 = vld [vmem:[%s0 + $0x3d4] sm:$0xf]
  %v264 = vld [vmem:[%s0 + $0x3d8] sm:$0xf]
  %v265 = vld [vmem:[%s0 + $0x3dc] sm:$0xf]
  %v266 = vld [vmem:[%s0 + $0x3e0] sm:$0xf]
  %v267 = vld [vmem:[%s0 + $0x3e4] sm:$0xf]
  %v268 = vld [vmem:[%s0 + $0x3e8] sm:$0xf]
  %v269 = vld [vmem:[%s0 + $0x3ec] sm:$0xf]
  %v270 = vld [vmem:[%s0 + $0x3f0] sm:$0xf]
  %v271 = vld [vmem:[%s0 + $0x3f4] sm:$0xf]
  %v272 = vld [vmem:[%s0 + $0x3f8] sm:$0xf]
  %v273 = vld [vmem:[%s0 + $0x3fc] sm:$0xf]
  %v274 = vld [vmem:[%s1] sm:$0xf]
  %v275 = vld [vmem:[%s1 + $0x4] sm:$0xf]
  %v276 = vld [vmem:[%s1 + $0x8] sm:$0xf]
  %v277 = vld [vmem:[%s1 + $0xc] sm:$0xf]
  %v278 = vld [vmem:[%s3] sm:$0x1]
  %v279 = vperm.slane %v278, 0
  %v536 = vunpack.c.l.b16 %v18
  %v537 = vunpack.c.l.b16 %v19
  %v538 = vunpack.c.l.b16 %v20
  %v539 = vunpack.c.l.b16 %v21
  %v540 = vunpack.c.l.b16 %v22
  %v541 = vunpack.c.l.b16 %v23
  %v542 = vunpack.c.l.b16 %v24
  %v543 = vunpack.c.l.b16 %v25
  %v544 = vunpack.c.l.b16 %v26
  %v545 = vunpack.c.l.b16 %v27
  %v546 = vunpack.c.l.b16 %v28
  %v547 = vunpack.c.l.b16 %v29
  %v548 = vunpack.c.l.b16 %v30
  %v549 = vunpack.c.l.b16 %v31
  %v550 = vunpack.c.l.b16 %v32
  %v551 = vunpack.c.l.b16 %v33
  %v552 = vunpack.c.l.b16 %v34
  %v553 = vunpack.c.l.b16 %v35
  %v554 = vunpack.c.l.b16 %v36
  %v555 = vunpack.c.l.b16 %v37
  %v556 = vunpack.c.l.b16 %v38
  %v557 = vunpack.c.l.b16 %v39
  %v558 = vunpack.c.l.b16 %v40
  %v559 = vunpack.c.l.b16 %v41
  %v560 = vunpack.c.l.b16 %v42
  %v561 = vunpack.c.l.b16 %v43
  %v562 = vunpack.c.l.b16 %v44
  %v563 = vunpack.c.l.b16 %v45
  %v564 = vunpack.c.l.b16 %v46
  %v565 = vunpack.c.l.b16 %v47
  %v566 = vunpack.c.l.b16 %v48
  %v567 = vunpack.c.l.b16 %v49
  %v568 = vunpack.c.l.b16 %v50
  %v569 = vunpack.c.l.b16 %v51
  %v570 = vunpack.c.l.b16 %v52
  %v571 = vunpack.c.l.b16 %v53
  %v572 = vunpack.c.l.b16 %v54
  %v573 = vunpack.c.l.b16 %v55
  %v574 = vunpack.c.l.b16 %v56
  %v575 = vunpack.c.l.b16 %v57
  %v576 = vunpack.c.l.b16 %v58
  %v577 = vunpack.c.l.b16 %v59
  %v578 = vunpack.c.l.b16 %v60
  %v579 = vunpack.c.l.b16 %v61
  %v580 = vunpack.c.l.b16 %v62
  %v581 = vunpack.c.l.b16 %v63
  %v582 = vunpack.c.l.b16 %v64
  %v583 = vunpack.c.l.b16 %v65
  %v584 = vunpack.c.l.b16 %v66
  %v585 = vunpack.c.l.b16 %v67
  %v586 = vunpack.c.l.b16 %v68
  %v587 = vunpack.c.l.b16 %v69
  %v588 = vunpack.c.l.b16 %v70
  %v589 = vunpack.c.l.b16 %v71
  %v590 = vunpack.c.l.b16 %v72
  %v591 = vunpack.c.l.b16 %v73
  %v592 = vunpack.c.l.b16 %v74
  %v593 = vunpack.c.l.b16 %v75
  %v594 = vunpack.c.l.b16 %v76
  %v595 = vunpack.c.l.b16 %v77
  %v596 = vunpack.c.l.b16 %v78
  %v597 = vunpack.c.l.b16 %v79
  %v598 = vunpack.c.l.b16 %v80
  %v599 = vunpack.c.l.b16 %v81
  %v600 = vunpack.c.l.b16 %v82
  %v601 = vunpack.c.l.b16 %v83
  %v602 = vunpack.c.l.b16 %v84
  %v603 = vunpack.c.l.b16 %v85
  %v604 = vunpack.c.l.b16 %v86
  %v605 = vunpack.c.l.b16 %v87
  %v606 = vunpack.c.l.b16 %v88
  %v607 = vunpack.c.l.b16 %v89
  %v608 = vunpack.c.l.b16 %v90
  %v609 = vunpack.c.l.b16 %v91
  %v610 = vunpack.c.l.b16 %v92
  %v611 = vunpack.c.l.b16 %v93
  %v612 = vunpack.c.l.b16 %v94
  %v613 = vunpack.c.l.b16 %v95
  %v614 = vunpack.c.l.b16 %v96
  %v615 = vunpack.c.l.b16 %v97
  %v616 = vunpack.c.l.b16 %v98
  %v617 = vunpack.c.l.b16 %v99
  %v618 = vunpack.c.l.b16 %v100
  %v619 = vunpack.c.l.b16 %v101
  %v620 = vunpack.c.l.b16 %v102
  %v621 = vunpack.c.l.b16 %v103
  %v622 = vunpack.c.l.b16 %v104
  %v623 = vunpack.c.l.b16 %v105
  %v624 = vunpack.c.l.b16 %v106
  %v625 = vunpack.c.l.b16 %v107
  %v626 = vunpack.c.l.b16 %v108
  %v627 = vunpack.c.l.b16 %v109
  %v628 = vunpack.c.l.b16 %v110
  %v629 = vunpack.c.l.b16 %v111
  %v630 = vunpack.c.l.b16 %v112
  %v631 = vunpack.c.l.b16 %v113
  %v632 = vunpack.c.l.b16 %v114
  %v633 = vunpack.c.l.b16 %v115
  %v634 = vunpack.c.l.b16 %v116
  %v635 = vunpack.c.l.b16 %v117
  %v636 = vunpack.c.l.b16 %v118
  %v637 = vunpack.c.l.b16 %v119
  %v638 = vunpack.c.l.b16 %v120
  %v639 = vunpack.c.l.b16 %v121
  %v640 = vunpack.c.l.b16 %v122
  %v641 = vunpack.c.l.b16 %v123
  %v642 = vunpack.c.l.b16 %v124
  %v643 = vunpack.c.l.b16 %v125
  %v644 = vunpack.c.l.b16 %v126
  %v645 = vunpack.c.l.b16 %v127
  %v646 = vunpack.c.l.b16 %v128
  %v647 = vunpack.c.l.b16 %v129
  %v648 = vunpack.c.l.b16 %v130
  %v649 = vunpack.c.l.b16 %v131
  %v650 = vunpack.c.l.b16 %v132
  %v651 = vunpack.c.l.b16 %v133
  %v652 = vunpack.c.l.b16 %v134
  %v653 = vunpack.c.l.b16 %v135
  %v654 = vunpack.c.l.b16 %v136
  %v655 = vunpack.c.l.b16 %v137
  %v656 = vunpack.c.l.b16 %v138
  %v657 = vunpack.c.l.b16 %v139
  %v658 = vunpack.c.l.b16 %v140
  %v659 = vunpack.c.l.b16 %v141
  %v660 = vunpack.c.l.b16 %v142
  %v661 = vunpack.c.l.b16 %v143
  %v662 = vunpack.c.l.b16 %v144
  %v663 = vunpack.c.l.b16 %v145
  %v664 = vunpack.c.l.b16 %v146
  %v665 = vunpack.c.l.b16 %v147
  %v666 = vunpack.c.l.b16 %v148
  %v667 = vunpack.c.l.b16 %v149
  %v668 = vunpack.c.l.b16 %v150
  %v669 = vunpack.c.l.b16 %v151
  %v670 = vunpack.c.l.b16 %v152
  %v671 = vunpack.c.l.b16 %v153
  %v672 = vunpack.c.l.b16 %v154
  %v673 = vunpack.c.l.b16 %v155
  %v674 = vunpack.c.l.b16 %v156
  %v675 = vunpack.c.l.b16 %v157
  %v676 = vunpack.c.l.b16 %v158
  %v677 = vunpack.c.l.b16 %v159
  %v678 = vunpack.c.l.b16 %v160
  %v679 = vunpack.c.l.b16 %v161
  %v680 = vunpack.c.l.b16 %v162
  %v681 = vunpack.c.l.b16 %v163
  %v682 = vunpack.c.l.b16 %v164
  %v683 = vunpack.c.l.b16 %v165
  %v684 = vunpack.c.l.b16 %v166
  %v685 = vunpack.c.l.b16 %v167
  %v686 = vunpack.c.l.b16 %v168
  %v687 = vunpack.c.l.b16 %v169
  %v688 = vunpack.c.l.b16 %v170
  %v689 = vunpack.c.l.b16 %v171
  %v690 = vunpack.c.l.b16 %v172
  %v691 = vunpack.c.l.b16 %v173
  %v692 = vunpack.c.l.b16 %v174
  %v693 = vunpack.c.l.b16 %v175
  %v694 = vunpack.c.l.b16 %v176
  %v695 = vunpack.c.l.b16 %v177
  %v696 = vunpack.c.l.b16 %v178
  %v697 = vunpack.c.l.b16 %v179
  %v698 = vunpack.c.l.b16 %v180
  %v699 = vunpack.c.l.b16 %v181
  %v700 = vunpack.c.l.b16 %v182
  %v701 = vunpack.c.l.b16 %v183
  %v702 = vunpack.c.l.b16 %v184
  %v703 = vunpack.c.l.b16 %v185
  %v704 = vunpack.c.l.b16 %v186
  %v705 = vunpack.c.l.b16 %v187
  %v706 = vunpack.c.l.b16 %v188
  %v707 = vunpack.c.l.b16 %v189
  %v708 = vunpack.c.l.b16 %v190
  %v709 = vunpack.c.l.b16 %v191
  %v710 = vunpack.c.l.b16 %v192
  %v711 = vunpack.c.l.b16 %v193
  %v712 = vunpack.c.l.b16 %v194
  %v713 = vunpack.c.l.b16 %v195
  %v714 = vunpack.c.l.b16 %v196
  %v715 = vunpack.c.l.b16 %v197
  %v716 = vunpack.c.l.b16 %v198
  %v717 = vunpack.c.l.b16 %v199
  %v718 = vunpack.c.l.b16 %v200
  %v719 = vunpack.c.l.b16 %v201
  %v720 = vunpack.c.l.b16 %v202
  %v721 = vunpack.c.l.b16 %v203
  %v722 = vunpack.c.l.b16 %v204
  %v723 = vunpack.c.l.b16 %v205
  %v724 = vunpack.c.l.b16 %v206
  %v725 = vunpack.c.l.b16 %v207
  %v726 = vunpack.c.l.b16 %v208
  %v727 = vunpack.c.l.b16 %v209
  %v728 = vunpack.c.l.b16 %v210
  %v729 = vunpack.c.l.b16 %v211
  %v730 = vunpack.c.l.b16 %v212
  %v731 = vunpack.c.l.b16 %v213
  %v732 = vunpack.c.l.b16 %v214
  %v733 = vunpack.c.l.b16 %v215
  %v734 = vunpack.c.l.b16 %v216
  %v735 = vunpack.c.l.b16 %v217
  %v736 = vunpack.c.l.b16 %v218
  %v737 = vunpack.c.l.b16 %v219
  %v738 = vunpack.c.l.b16 %v220
  %v739 = vunpack.c.l.b16 %v221
  %v740 = vunpack.c.l.b16 %v222
  %v741 = vunpack.c.l.b16 %v223
  %v742 = vunpack.c.l.b16 %v224
  %v743 = vunpack.c.l.b16 %v225
  %v744 = vunpack.c.l.b16 %v226
  %v745 = vunpack.c.l.b16 %v227
  %v746 = vunpack.c.l.b16 %v228
  %v747 = vunpack.c.l.b16 %v229
  %v748 = vunpack.c.l.b16 %v230
  %v749 = vunpack.c.l.b16 %v231
  %v750 = vunpack.c.l.b16 %v232
  %v751 = vunpack.c.l.b16 %v233
  %v752 = vunpack.c.l.b16 %v234
  %v753 = vunpack.c.l.b16 %v235
  %v754 = vunpack.c.l.b16 %v236
  %v755 = vunpack.c.l.b16 %v237
  %v756 = vunpack.c.l.b16 %v238
  %v757 = vunpack.c.l.b16 %v239
  %v758 = vunpack.c.l.b16 %v240
  %v759 = vunpack.c.l.b16 %v241
  %v760 = vunpack.c.l.b16 %v242
  %v761 = vunpack.c.l.b16 %v243
  %v762 = vunpack.c.l.b16 %v244
  %v763 = vunpack.c.l.b16 %v245
  %v764 = vunpack.c.l.b16 %v246
  %v765 = vunpack.c.l.b16 %v247
  %v766 = vunpack.c.l.b16 %v248
  %v767 = vunpack.c.l.b16 %v249
  %v768 = vunpack.c.l.b16 %v250
  %v769 = vunpack.c.l.b16 %v251
  %v770 = vunpack.c.l.b16 %v252
  %v771 = vunpack.c.l.b16 %v253
  %v772 = vunpack.c.l.b16 %v254
  %v773 = vunpack.c.l.b16 %v255
  %v774 = vunpack.c.l.b16 %v256
  %v775 = vunpack.c.l.b16 %v257
  %v776 = vunpack.c.l.b16 %v258
  %v777 = vunpack.c.l.b16 %v259
  %v778 = vunpack.c.l.b16 %v260
  %v779 = vunpack.c.l.b16 %v261
  %v780 = vunpack.c.l.b16 %v262
  %v781 = vunpack.c.l.b16 %v263
  %v782 = vunpack.c.l.b16 %v264
  %v783 = vunpack.c.l.b16 %v265
  %v784 = vunpack.c.l.b16 %v266
  %v785 = vunpack.c.l.b16 %v267
  %v786 = vunpack.c.l.b16 %v268
  %v787 = vunpack.c.l.b16 %v269
  %v788 = vunpack.c.l.b16 %v270
  %v789 = vunpack.c.l.b16 %v271
  %v790 = vunpack.c.l.b16 %v272
  %v791 = vunpack.c.l.b16 %v273
  %v792 = vpack.c.b16 %v537, %v536
  %v793 = vpack.c.b16 %v539, %v538
  %v794 = vpack.c.b16 %v541, %v540
  %v795 = vpack.c.b16 %v543, %v542
  %v796 = vpack.c.b16 %v545, %v544
  %v797 = vpack.c.b16 %v547, %v546
  %v798 = vpack.c.b16 %v549, %v548
  %v799 = vpack.c.b16 %v551, %v550
  %v800 = vpack.c.b16 %v553, %v552
  %v801 = vpack.c.b16 %v555, %v554
  %v802 = vpack.c.b16 %v557, %v556
  %v803 = vpack.c.b16 %v559, %v558
  %v804 = vpack.c.b16 %v561, %v560
  %v805 = vpack.c.b16 %v563, %v562
  %v806 = vpack.c.b16 %v565, %v564
  %v807 = vpack.c.b16 %v567, %v566
  %v808 = vpack.c.b16 %v569, %v568
  %v809 = vpack.c.b16 %v571, %v570
  %v810 = vpack.c.b16 %v573, %v572
  %v811 = vpack.c.b16 %v575, %v574
  %v812 = vpack.c.b16 %v577, %v576
  %v813 = vpack.c.b16 %v579, %v578
  %v814 = vpack.c.b16 %v581, %v580
  %v815 = vpack.c.b16 %v583, %v582
  %v816 = vpack.c.b16 %v585, %v584
  %v817 = vpack.c.b16 %v587, %v586
  %v818 = vpack.c.b16 %v589, %v588
  %v819 = vpack.c.b16 %v591, %v590
  %v820 = vpack.c.b16 %v593, %v592
  %v821 = vpack.c.b16 %v595, %v594
  %v822 = vpack.c.b16 %v597, %v596
  %v823 = vpack.c.b16 %v599, %v598
  %v824 = vpack.c.b16 %v601, %v600
  %v825 = vpack.c.b16 %v603, %v602
  %v826 = vpack.c.b16 %v605, %v604
  %v827 = vpack.c.b16 %v607, %v606
  %v828 = vpack.c.b16 %v609, %v608
  %v829 = vpack.c.b16 %v611, %v610
  %v830 = vpack.c.b16 %v613, %v612
  %v831 = vpack.c.b16 %v615, %v614
  %v832 = vpack.c.b16 %v617, %v616
  %v833 = vpack.c.b16 %v619, %v618
  %v834 = vpack.c.b16 %v621, %v620
  %v835 = vpack.c.b16 %v623, %v622
  %v836 = vpack.c.b16 %v625, %v624
  %v837 = vpack.c.b16 %v627, %v626
  %v838 = vpack.c.b16 %v629, %v628
  %v839 = vpack.c.b16 %v631, %v630
  %v840 = vpack.c.b16 %v633, %v632
  %v841 = vpack.c.b16 %v635, %v634
  %v842 = vpack.c.b16 %v637, %v636
  %v843 = vpack.c.b16 %v639, %v638
  %v844 = vpack.c.b16 %v641, %v640
  %v845 = vpack.c.b16 %v643, %v642
  %v846 = vpack.c.b16 %v645, %v644
  %v847 = vpack.c.b16 %v647, %v646
  %v848 = vpack.c.b16 %v649, %v648
  %v849 = vpack.c.b16 %v651, %v650
  %v850 = vpack.c.b16 %v653, %v652
  %v851 = vpack.c.b16 %v655, %v654
  %v852 = vpack.c.b16 %v657, %v656
  %v853 = vpack.c.b16 %v659, %v658
  %v854 = vpack.c.b16 %v661, %v660
  %v855 = vpack.c.b16 %v663, %v662
  %v856 = vpack.c.b16 %v665, %v664
  %v857 = vpack.c.b16 %v667, %v666
  %v858 = vpack.c.b16 %v669, %v668
  %v859 = vpack.c.b16 %v671, %v670
  %v860 = vpack.c.b16 %v673, %v672
  %v861 = vpack.c.b16 %v675, %v674
  %v862 = vpack.c.b16 %v677, %v676
  %v863 = vpack.c.b16 %v679, %v678
  %v864 = vpack.c.b16 %v681, %v680
  %v865 = vpack.c.b16 %v683, %v682
  %v866 = vpack.c.b16 %v685, %v684
  %v867 = vpack.c.b16 %v687, %v686
  %v868 = vpack.c.b16 %v689, %v688
  %v869 = vpack.c.b16 %v691, %v690
  %v870 = vpack.c.b16 %v693, %v692
  %v871 = vpack.c.b16 %v695, %v694
  %v872 = vpack.c.b16 %v697, %v696
  %v873 = vpack.c.b16 %v699, %v698
  %v874 = vpack.c.b16 %v701, %v700
  %v875 = vpack.c.b16 %v703, %v702
  %v876 = vpack.c.b16 %v705, %v704
  %v877 = vpack.c.b16 %v707, %v706
  %v878 = vpack.c.b16 %v709, %v708
  %v879 = vpack.c.b16 %v711, %v710
  %v880 = vpack.c.b16 %v713, %v712
  %v881 = vpack.c.b16 %v715, %v714
  %v882 = vpack.c.b16 %v717, %v716
  %v883 = vpack.c.b16 %v719, %v718
  %v884 = vpack.c.b16 %v721, %v720
  %v885 = vpack.c.b16 %v723, %v722
  %v886 = vpack.c.b16 %v725, %v724
  %v887 = vpack.c.b16 %v727, %v726
  %v888 = vpack.c.b16 %v729, %v728
  %v889 = vpack.c.b16 %v731, %v730
  %v890 = vpack.c.b16 %v733, %v732
  %v891 = vpack.c.b16 %v735, %v734
  %v892 = vpack.c.b16 %v737, %v736
  %v893 = vpack.c.b16 %v739, %v738
  %v894 = vpack.c.b16 %v741, %v740
  %v895 = vpack.c.b16 %v743, %v742
  %v896 = vpack.c.b16 %v745, %v744
  %v897 = vpack.c.b16 %v747, %v746
  %v898 = vpack.c.b16 %v749, %v748
  %v899 = vpack.c.b16 %v751, %v750
  %v900 = vpack.c.b16 %v753, %v752
  %v901 = vpack.c.b16 %v755, %v754
  %v902 = vpack.c.b16 %v757, %v756
  %v903 = vpack.c.b16 %v759, %v758
  %v904 = vpack.c.b16 %v761, %v760
  %v905 = vpack.c.b16 %v763, %v762
  %v906 = vpack.c.b16 %v765, %v764
  %v907 = vpack.c.b16 %v767, %v766
  %v908 = vpack.c.b16 %v769, %v768
  %v909 = vpack.c.b16 %v771, %v770
  %v910 = vpack.c.b16 %v773, %v772
  %v911 = vpack.c.b16 %v775, %v774
  %v912 = vpack.c.b16 %v777, %v776
  %v913 = vpack.c.b16 %v779, %v778
  %v914 = vpack.c.b16 %v781, %v780
  %v915 = vpack.c.b16 %v783, %v782
  %v916 = vpack.c.b16 %v785, %v784
  %v917 = vpack.c.b16 %v787, %v786
  %v918 = vpack.c.b16 %v789, %v788
  %v919 = vpack.c.b16 %v791, %v790
  %v924 = vunpack.c.l.b16 %v274
  %v925 = vunpack.c.l.b16 %v275
  %v926 = vunpack.c.l.b16 %v276
  %v927 = vunpack.c.l.b16 %v277
  %v928 = vpack.c.b16 %v925, %v924
  %v929 = vpack.c.b16 %v927, %v926
  %vm932 = vcmask 261120
  %v934 = vsel %vm932, %v792, 0
  %v937 = vsel %vm932, %v793, 0
  %v940 = vsel %vm932, %v794, 0
  %v943 = vsel %vm932, %v795, 0
  %v946 = vsel %vm932, %v796, 0
  %v949 = vsel %vm932, %v797, 0
  %v952 = vsel %vm932, %v798, 0
  %v955 = vsel %vm932, %v799, 0
  %v958 = vsel %vm932, %v800, 0
  %v961 = vsel %vm932, %v801, 0
  %v964 = vsel %vm932, %v802, 0
  %v967 = vsel %vm932, %v803, 0
  %v970 = vsel %vm932, %v804, 0
  %v973 = vsel %vm932, %v805, 0
  %v976 = vsel %vm932, %v806, 0
  %v979 = vsel %vm932, %v807, 0
  %v982 = vsel %vm932, %v808, 0
  %v985 = vsel %vm932, %v809, 0
  %v988 = vsel %vm932, %v810, 0
  %v991 = vsel %vm932, %v811, 0
  %v994 = vsel %vm932, %v812, 0
  %v997 = vsel %vm932, %v813, 0
  %v1000 = vsel %vm932, %v814, 0
  %v1003 = vsel %vm932, %v815, 0
  %v1006 = vsel %vm932, %v816, 0
  %v1009 = vsel %vm932, %v817, 0
  %v1012 = vsel %vm932, %v818, 0
  %v1015 = vsel %vm932, %v819, 0
  %v1018 = vsel %vm932, %v820, 0
  %v1021 = vsel %vm932, %v821, 0
  %v1024 = vsel %vm932, %v822, 0
  %v1027 = vsel %vm932, %v823, 0
  %v1030 = vsel %vm932, %v824, 0
  %v1033 = vsel %vm932, %v825, 0
  %v1036 = vsel %vm932, %v826, 0
  %v1039 = vsel %vm932, %v827, 0
  %v1042 = vsel %vm932, %v828, 0
  %v1045 = vsel %vm932, %v829, 0
  %v1048 = vsel %vm932, %v830, 0
  %v1051 = vsel %vm932, %v831, 0
  %v1054 = vsel %vm932, %v832, 0
  %v1057 = vsel %vm932, %v833, 0
  %v1060 = vsel %vm932, %v834, 0
  %v1063 = vsel %vm932, %v835, 0
  %v1066 = vsel %vm932, %v836, 0
  %v1069 = vsel %vm932, %v837, 0
  %v1072 = vsel %vm932, %v838, 0
  %v1075 = vsel %vm932, %v839, 0
  %v1078 = vsel %vm932, %v840, 0
  %v1081 = vsel %vm932, %v841, 0
  %v1084 = vsel %vm932, %v842, 0
  %v1087 = vsel %vm932, %v843, 0
  %v1090 = vsel %vm932, %v844, 0
  %v1093 = vsel %vm932, %v845, 0
  %v1096 = vsel %vm932, %v846, 0
  %v1099 = vsel %vm932, %v847, 0
  %v1102 = vsel %vm932, %v848, 0
  %v1105 = vsel %vm932, %v849, 0
  %v1108 = vsel %vm932, %v850, 0
  %v1111 = vsel %vm932, %v851, 0
  %v1114 = vsel %vm932, %v852, 0
  %v1117 = vsel %vm932, %v853, 0
  %v1120 = vsel %vm932, %v854, 0
  %v1123 = vsel %vm932, %v855, 0
  %v1126 = vsel %vm932, %v856, 0
  %v1129 = vsel %vm932, %v857, 0
  %v1132 = vsel %vm932, %v858, 0
  %v1135 = vsel %vm932, %v859, 0
  %v1138 = vsel %vm932, %v860, 0
  %v1141 = vsel %vm932, %v861, 0
  %v1144 = vsel %vm932, %v862, 0
  %v1147 = vsel %vm932, %v863, 0
  %v1150 = vsel %vm932, %v864, 0
  %v1153 = vsel %vm932, %v865, 0
  %v1156 = vsel %vm932, %v866, 0
  %v1159 = vsel %vm932, %v867, 0
  %v1162 = vsel %vm932, %v868, 0
  %v1165 = vsel %vm932, %v869, 0
  %v1168 = vsel %vm932, %v870, 0
  %v1171 = vsel %vm932, %v871, 0
  %v1174 = vsel %vm932, %v872, 0
  %v1177 = vsel %vm932, %v873, 0
  %v1180 = vsel %vm932, %v874, 0
  %v1183 = vsel %vm932, %v875, 0
  %v1186 = vsel %vm932, %v876, 0
  %v1189 = vsel %vm932, %v877, 0
  %v1192 = vsel %vm932, %v878, 0
  %v1195 = vsel %vm932, %v879, 0
  %v1198 = vsel %vm932, %v880, 0
  %v1201 = vsel %vm932, %v881, 0
  %v1204 = vsel %vm932, %v882, 0
  %v1207 = vsel %vm932, %v883, 0
  %v1210 = vsel %vm932, %v884, 0
  %v1213 = vsel %vm932, %v885, 0
  %v1216 = vsel %vm932, %v886, 0
  %v1219 = vsel %vm932, %v887, 0
  %v1222 = vsel %vm932, %v888, 0
  %v1225 = vsel %vm932, %v889, 0
  %v1228 = vsel %vm932, %v890, 0
  %v1231 = vsel %vm932, %v891, 0
  %v1234 = vsel %vm932, %v892, 0
  %v1237 = vsel %vm932, %v893, 0
  %v1240 = vsel %vm932, %v894, 0
  %v1243 = vsel %vm932, %v895, 0
  %v1246 = vsel %vm932, %v896, 0
  %v1249 = vsel %vm932, %v897, 0
  %v1252 = vsel %vm932, %v898, 0
  %v1255 = vsel %vm932, %v899, 0
  %v1258 = vsel %vm932, %v900, 0
  %v1261 = vsel %vm932, %v901, 0
  %v1264 = vsel %vm932, %v902, 0
  %v1267 = vsel %vm932, %v903, 0
  %v1270 = vsel %vm932, %v904, 0
  %v1273 = vsel %vm932, %v905, 0
  %v1276 = vsel %vm932, %v906, 0
  %v1279 = vsel %vm932, %v907, 0
  %v1282 = vsel %vm932, %v908, 0
  %v1285 = vsel %vm932, %v909, 0
  %v1288 = vsel %vm932, %v910, 0
  %v1291 = vsel %vm932, %v911, 0
  %v1294 = vsel %vm932, %v912, 0
  %v1297 = vsel %vm932, %v913, 0
  %v1300 = vsel %vm932, %v914, 0
  %v1303 = vsel %vm932, %v915, 0
  %v1306 = vsel %vm932, %v916, 0
  %v1309 = vsel %vm932, %v917, 0
  %v1312 = vsel %vm932, %v918, 0
  %v1315 = vsel %vm932, %v919, 0
  %1317 = vmatpush.bf16.msra.mxu0 0
  %1318 = vmatpush.bf16.msra.mxu0 0
  %1319 = vmatpush.bf16.msra.mxu0 0
  %1320 = vmatpush.bf16.msra.mxu0 0
  %1321 = vmatpush.bf16.msra.mxu0 0
  %1322 = vmatpush.bf16.msra.mxu0 0
  %1323 = vmatpush.bf16.msra.mxu0 %v929
  %1324 = vmatpush.bf16.msra.mxu0 %v928
  %1325 = vmatmul.bf16.gmra.mxu0 %v934
  %v1326 = vpop.f32.mrf.mxu0
  %v1327 = vadd.f32 %v279, %v1326
  %v1328 = vpop.f32.mrf.mxu0
  %v1329 = vadd.f32 %v279, %v1328
  %1330 = vmatmul.bf16.gmra.mxu0 %v937
  %v1331 = vpop.f32.mrf.mxu0
  %v1332 = vadd.f32 %v279, %v1331
  %v1333 = vpop.f32.mrf.mxu0
  %v1334 = vadd.f32 %v279, %v1333
  %1335 = vmatmul.bf16.gmra.mxu0 %v940
  %v1336 = vpop.f32.mrf.mxu0
  %v1337 = vadd.f32 %v279, %v1336
  %v1338 = vpop.f32.mrf.mxu0
  %v1339 = vadd.f32 %v279, %v1338
  %1340 = vmatmul.bf16.gmra.mxu0 %v943
  %v1341 = vpop.f32.mrf.mxu0
  %v1342 = vadd.f32 %v279, %v1341
  %v1343 = vpop.f32.mrf.mxu0
  %v1344 = vadd.f32 %v279, %v1343
  %1345 = vmatmul.bf16.gmra.mxu0 %v946
  %v1346 = vpop.f32.mrf.mxu0
  %v1347 = vadd.f32 %v279, %v1346
  %v1348 = vpop.f32.mrf.mxu0
  %v1349 = vadd.f32 %v279, %v1348
  %1350 = vmatmul.bf16.gmra.mxu0 %v949
  %v1351 = vpop.f32.mrf.mxu0
  %v1352 = vadd.f32 %v279, %v1351
  %v1353 = vpop.f32.mrf.mxu0
  %v1354 = vadd.f32 %v279, %v1353
  %1355 = vmatmul.bf16.gmra.mxu0 %v952
  %v1356 = vpop.f32.mrf.mxu0
  %v1357 = vadd.f32 %v279, %v1356
  %v1358 = vpop.f32.mrf.mxu0
  %v1359 = vadd.f32 %v279, %v1358
  %1360 = vmatmul.bf16.gmra.mxu0 %v955
  %v1361 = vpop.f32.mrf.mxu0
  %v1362 = vadd.f32 %v279, %v1361
  %v1363 = vpop.f32.mrf.mxu0
  %v1364 = vadd.f32 %v279, %v1363
  %1365 = vmatmul.bf16.gmra.mxu0 %v958
  %v1366 = vpop.f32.mrf.mxu0
  %v1367 = vadd.f32 %v279, %v1366
  %v1368 = vpop.f32.mrf.mxu0
  %v1369 = vadd.f32 %v279, %v1368
  %1370 = vmatmul.bf16.gmra.mxu0 %v961
  %v1371 = vpop.f32.mrf.mxu0
  %v1372 = vadd.f32 %v279, %v1371
  %v1373 = vpop.f32.mrf.mxu0
  %v1374 = vadd.f32 %v279, %v1373
  %1375 = vmatmul.bf16.gmra.mxu0 %v964
  %v1376 = vpop.f32.mrf.mxu0
  %v1377 = vadd.f32 %v279, %v1376
  %v1378 = vpop.f32.mrf.mxu0
  %v1379 = vadd.f32 %v279, %v1378
  %1380 = vmatmul.bf16.gmra.mxu0 %v967
  %v1381 = vpop.f32.mrf.mxu0
  %v1382 = vadd.f32 %v279, %v1381
  %v1383 = vpop.f32.mrf.mxu0
  %v1384 = vadd.f32 %v279, %v1383
  %1385 = vmatmul.bf16.gmra.mxu0 %v970
  %v1386 = vpop.f32.mrf.mxu0
  %v1387 = vadd.f32 %v279, %v1386
  %v1388 = vpop.f32.mrf.mxu0
  %v1389 = vadd.f32 %v279, %v1388
  %1390 = vmatmul.bf16.gmra.mxu0 %v973
  %v1391 = vpop.f32.mrf.mxu0
  %v1392 = vadd.f32 %v279, %v1391
  %v1393 = vpop.f32.mrf.mxu0
  %v1394 = vadd.f32 %v279, %v1393
  %1395 = vmatmul.bf16.gmra.mxu0 %v976
  %v1396 = vpop.f32.mrf.mxu0
  %v1397 = vadd.f32 %v279, %v1396
  %v1398 = vpop.f32.mrf.mxu0
  %v1399 = vadd.f32 %v279, %v1398
  %1400 = vmatmul.bf16.gmra.mxu0 %v979
  %v1401 = vpop.f32.mrf.mxu0
  %v1402 = vadd.f32 %v279, %v1401
  %v1403 = vpop.f32.mrf.mxu0
  %v1404 = vadd.f32 %v279, %v1403
  %1405 = vmatmul.bf16.gmra.mxu0 %v982
  %v1406 = vpop.f32.mrf.mxu0
  %v1407 = vadd.f32 %v279, %v1406
  %v1408 = vpop.f32.mrf.mxu0
  %v1409 = vadd.f32 %v279, %v1408
  %1410 = vmatmul.bf16.gmra.mxu0 %v985
  %v1411 = vpop.f32.mrf.mxu0
  %v1412 = vadd.f32 %v279, %v1411
  %v1413 = vpop.f32.mrf.mxu0
  %v1414 = vadd.f32 %v279, %v1413
  %1415 = vmatmul.bf16.gmra.mxu0 %v988
  %v1416 = vpop.f32.mrf.mxu0
  %v1417 = vadd.f32 %v279, %v1416
  %v1418 = vpop.f32.mrf.mxu0
  %v1419 = vadd.f32 %v279, %v1418
  %1420 = vmatmul.bf16.gmra.mxu0 %v991
  %v1421 = vpop.f32.mrf.mxu0
  %v1422 = vadd.f32 %v279, %v1421
  %v1423 = vpop.f32.mrf.mxu0
  %v1424 = vadd.f32 %v279, %v1423
  %1425 = vmatmul.bf16.gmra.mxu0 %v994
  %v1426 = vpop.f32.mrf.mxu0
  %v1427 = vadd.f32 %v279, %v1426
  %v1428 = vpop.f32.mrf.mxu0
  %v1429 = vadd.f32 %v279, %v1428
  %1430 = vmatmul.bf16.gmra.mxu0 %v997
  %v1431 = vpop.f32.mrf.mxu0
  %v1432 = vadd.f32 %v279, %v1431
  %v1433 = vpop.f32.mrf.mxu0
  %v1434 = vadd.f32 %v279, %v1433
  %1435 = vmatmul.bf16.gmra.mxu0 %v1000
  %v1436 = vpop.f32.mrf.mxu0
  %v1437 = vadd.f32 %v279, %v1436
  %v1438 = vpop.f32.mrf.mxu0
  %v1439 = vadd.f32 %v279, %v1438
  %1440 = vmatmul.bf16.gmra.mxu0 %v1003
  %v1441 = vpop.f32.mrf.mxu0
  %v1442 = vadd.f32 %v279, %v1441
  %v1443 = vpop.f32.mrf.mxu0
  %v1444 = vadd.f32 %v279, %v1443
  %1445 = vmatmul.bf16.gmra.mxu0 %v1006
  %v1446 = vpop.f32.mrf.mxu0
  %v1447 = vadd.f32 %v279, %v1446
  %v1448 = vpop.f32.mrf.mxu0
  %v1449 = vadd.f32 %v279, %v1448
  %1450 = vmatmul.bf16.gmra.mxu0 %v1009
  %v1451 = vpop.f32.mrf.mxu0
  %v1452 = vadd.f32 %v279, %v1451
  %v1453 = vpop.f32.mrf.mxu0
  %v1454 = vadd.f32 %v279, %v1453
  %1455 = vmatmul.bf16.gmra.mxu0 %v1012
  %v1456 = vpop.f32.mrf.mxu0
  %v1457 = vadd.f32 %v279, %v1456
  %v1458 = vpop.f32.mrf.mxu0
  %v1459 = vadd.f32 %v279, %v1458
  %1460 = vmatmul.bf16.gmra.mxu0 %v1015
  %v1461 = vpop.f32.mrf.mxu0
  %v1462 = vadd.f32 %v279, %v1461
  %v1463 = vpop.f32.mrf.mxu0
  %v1464 = vadd.f32 %v279, %v1463
  %1465 = vmatmul.bf16.gmra.mxu0 %v1018
  %v1466 = vpop.f32.mrf.mxu0
  %v1467 = vadd.f32 %v279, %v1466
  %v1468 = vpop.f32.mrf.mxu0
  %v1469 = vadd.f32 %v279, %v1468
  %1470 = vmatmul.bf16.gmra.mxu0 %v1021
  %v1471 = vpop.f32.mrf.mxu0
  %v1472 = vadd.f32 %v279, %v1471
  %v1473 = vpop.f32.mrf.mxu0
  %v1474 = vadd.f32 %v279, %v1473
  %1475 = vmatmul.bf16.gmra.mxu0 %v1024
  %v1476 = vpop.f32.mrf.mxu0
  %v1477 = vadd.f32 %v279, %v1476
  %v1478 = vpop.f32.mrf.mxu0
  %v1479 = vadd.f32 %v279, %v1478
  %1480 = vmatmul.bf16.gmra.mxu0 %v1027
  %v1481 = vpop.f32.mrf.mxu0
  %v1482 = vadd.f32 %v279, %v1481
  %v1483 = vpop.f32.mrf.mxu0
  %v1484 = vadd.f32 %v279, %v1483
  %1485 = vmatmul.bf16.gmra.mxu0 %v1030
  %v1486 = vpop.f32.mrf.mxu0
  %v1487 = vadd.f32 %v279, %v1486
  %v1488 = vpop.f32.mrf.mxu0
  %v1489 = vadd.f32 %v279, %v1488
  %1490 = vmatmul.bf16.gmra.mxu0 %v1033
  %v1491 = vpop.f32.mrf.mxu0
  %v1492 = vadd.f32 %v279, %v1491
  %v1493 = vpop.f32.mrf.mxu0
  %v1494 = vadd.f32 %v279, %v1493
  %1495 = vmatmul.bf16.gmra.mxu0 %v1036
  %v1496 = vpop.f32.mrf.mxu0
  %v1497 = vadd.f32 %v279, %v1496
  %v1498 = vpop.f32.mrf.mxu0
  %v1499 = vadd.f32 %v279, %v1498
  %1500 = vmatmul.bf16.gmra.mxu0 %v1039
  %v1501 = vpop.f32.mrf.mxu0
  %v1502 = vadd.f32 %v279, %v1501
  %v1503 = vpop.f32.mrf.mxu0
  %v1504 = vadd.f32 %v279, %v1503
  %1505 = vmatmul.bf16.gmra.mxu0 %v1042
  %v1506 = vpop.f32.mrf.mxu0
  %v1507 = vadd.f32 %v279, %v1506
  %v1508 = vpop.f32.mrf.mxu0
  %v1509 = vadd.f32 %v279, %v1508
  %1510 = vmatmul.bf16.gmra.mxu0 %v1045
  %v1511 = vpop.f32.mrf.mxu0
  %v1512 = vadd.f32 %v279, %v1511
  %v1513 = vpop.f32.mrf.mxu0
  %v1514 = vadd.f32 %v279, %v1513
  %1515 = vmatmul.bf16.gmra.mxu0 %v1048
  %v1516 = vpop.f32.mrf.mxu0
  %v1517 = vadd.f32 %v279, %v1516
  %v1518 = vpop.f32.mrf.mxu0
  %v1519 = vadd.f32 %v279, %v1518
  %1520 = vmatmul.bf16.gmra.mxu0 %v1051
  %v1521 = vpop.f32.mrf.mxu0
  %v1522 = vadd.f32 %v279, %v1521
  %v1523 = vpop.f32.mrf.mxu0
  %v1524 = vadd.f32 %v279, %v1523
  %1525 = vmatmul.bf16.gmra.mxu0 %v1054
  %v1526 = vpop.f32.mrf.mxu0
  %v1527 = vadd.f32 %v279, %v1526
  %v1528 = vpop.f32.mrf.mxu0
  %v1529 = vadd.f32 %v279, %v1528
  %1530 = vmatmul.bf16.gmra.mxu0 %v1057
  %v1531 = vpop.f32.mrf.mxu0
  %v1532 = vadd.f32 %v279, %v1531
  %v1533 = vpop.f32.mrf.mxu0
  %v1534 = vadd.f32 %v279, %v1533
  %1535 = vmatmul.bf16.gmra.mxu0 %v1060
  %v1536 = vpop.f32.mrf.mxu0
  %v1537 = vadd.f32 %v279, %v1536
  %v1538 = vpop.f32.mrf.mxu0
  %v1539 = vadd.f32 %v279, %v1538
  %1540 = vmatmul.bf16.gmra.mxu0 %v1063
  %v1541 = vpop.f32.mrf.mxu0
  %v1542 = vadd.f32 %v279, %v1541
  %v1543 = vpop.f32.mrf.mxu0
  %v1544 = vadd.f32 %v279, %v1543
  %1545 = vmatmul.bf16.gmra.mxu0 %v1066
  %v1546 = vpop.f32.mrf.mxu0
  %v1547 = vadd.f32 %v279, %v1546
  %v1548 = vpop.f32.mrf.mxu0
  %v1549 = vadd.f32 %v279, %v1548
  %1550 = vmatmul.bf16.gmra.mxu0 %v1069
  %v1551 = vpop.f32.mrf.mxu0
  %v1552 = vadd.f32 %v279, %v1551
  %v1553 = vpop.f32.mrf.mxu0
  %v1554 = vadd.f32 %v279, %v1553
  %1555 = vmatmul.bf16.gmra.mxu0 %v1072
  %v1556 = vpop.f32.mrf.mxu0
  %v1557 = vadd.f32 %v279, %v1556
  %v1558 = vpop.f32.mrf.mxu0
  %v1559 = vadd.f32 %v279, %v1558
  %1560 = vmatmul.bf16.gmra.mxu0 %v1075
  %v1561 = vpop.f32.mrf.mxu0
  %v1562 = vadd.f32 %v279, %v1561
  %v1563 = vpop.f32.mrf.mxu0
  %v1564 = vadd.f32 %v279, %v1563
  %1565 = vmatmul.bf16.gmra.mxu0 %v1078
  %v1566 = vpop.f32.mrf.mxu0
  %v1567 = vadd.f32 %v279, %v1566
  %v1568 = vpop.f32.mrf.mxu0
  %v1569 = vadd.f32 %v279, %v1568
  %1570 = vmatmul.bf16.gmra.mxu0 %v1081
  %v1571 = vpop.f32.mrf.mxu0
  %v1572 = vadd.f32 %v279, %v1571
  %v1573 = vpop.f32.mrf.mxu0
  %v1574 = vadd.f32 %v279, %v1573
  %1575 = vmatmul.bf16.gmra.mxu0 %v1084
  %v1576 = vpop.f32.mrf.mxu0
  %v1577 = vadd.f32 %v279, %v1576
  %v1578 = vpop.f32.mrf.mxu0
  %v1579 = vadd.f32 %v279, %v1578
  %1580 = vmatmul.bf16.gmra.mxu0 %v1087
  %v1581 = vpop.f32.mrf.mxu0
  %v1582 = vadd.f32 %v279, %v1581
  %v1583 = vpop.f32.mrf.mxu0
  %v1584 = vadd.f32 %v279, %v1583
  %1585 = vmatmul.bf16.gmra.mxu0 %v1090
  %v1586 = vpop.f32.mrf.mxu0
  %v1587 = vadd.f32 %v279, %v1586
  %v1588 = vpop.f32.mrf.mxu0
  %v1589 = vadd.f32 %v279, %v1588
  %1590 = vmatmul.bf16.gmra.mxu0 %v1093
  %v1591 = vpop.f32.mrf.mxu0
  %v1592 = vadd.f32 %v279, %v1591
  %v1593 = vpop.f32.mrf.mxu0
  %v1594 = vadd.f32 %v279, %v1593
  %1595 = vmatmul.bf16.gmra.mxu0 %v1096
  %v1596 = vpop.f32.mrf.mxu0
  %v1597 = vadd.f32 %v279, %v1596
  %v1598 = vpop.f32.mrf.mxu0
  %v1599 = vadd.f32 %v279, %v1598
  %1600 = vmatmul.bf16.gmra.mxu0 %v1099
  %v1601 = vpop.f32.mrf.mxu0
  %v1602 = vadd.f32 %v279, %v1601
  %v1603 = vpop.f32.mrf.mxu0
  %v1604 = vadd.f32 %v279, %v1603
  %1605 = vmatmul.bf16.gmra.mxu0 %v1102
  %v1606 = vpop.f32.mrf.mxu0
  %v1607 = vadd.f32 %v279, %v1606
  %v1608 = vpop.f32.mrf.mxu0
  %v1609 = vadd.f32 %v279, %v1608
  %1610 = vmatmul.bf16.gmra.mxu0 %v1105
  %v1611 = vpop.f32.mrf.mxu0
  %v1612 = vadd.f32 %v279, %v1611
  %v1613 = vpop.f32.mrf.mxu0
  %v1614 = vadd.f32 %v279, %v1613
  %1615 = vmatmul.bf16.gmra.mxu0 %v1108
  %v1616 = vpop.f32.mrf.mxu0
  %v1617 = vadd.f32 %v279, %v1616
  %v1618 = vpop.f32.mrf.mxu0
  %v1619 = vadd.f32 %v279, %v1618
  %1620 = vmatmul.bf16.gmra.mxu0 %v1111
  %v1621 = vpop.f32.mrf.mxu0
  %v1622 = vadd.f32 %v279, %v1621
  %v1623 = vpop.f32.mrf.mxu0
  %v1624 = vadd.f32 %v279, %v1623
  %1625 = vmatmul.bf16.gmra.mxu0 %v1114
  %v1626 = vpop.f32.mrf.mxu0
  %v1627 = vadd.f32 %v279, %v1626
  %v1628 = vpop.f32.mrf.mxu0
  %v1629 = vadd.f32 %v279, %v1628
  %1630 = vmatmul.bf16.gmra.mxu0 %v1117
  %v1631 = vpop.f32.mrf.mxu0
  %v1632 = vadd.f32 %v279, %v1631
  %v1633 = vpop.f32.mrf.mxu0
  %v1634 = vadd.f32 %v279, %v1633
  %1635 = vmatmul.bf16.gmra.mxu0 %v1120
  %v1636 = vpop.f32.mrf.mxu0
  %v1637 = vadd.f32 %v279, %v1636
  %v1638 = vpop.f32.mrf.mxu0
  %v1639 = vadd.f32 %v279, %v1638
  %1640 = vmatmul.bf16.gmra.mxu0 %v1123
  %v1641 = vpop.f32.mrf.mxu0
  %v1642 = vadd.f32 %v279, %v1641
  %v1643 = vpop.f32.mrf.mxu0
  %v1644 = vadd.f32 %v279, %v1643
  %1645 = vmatmul.bf16.gmra.mxu0 %v1126
  %v1646 = vpop.f32.mrf.mxu0
  %v1647 = vadd.f32 %v279, %v1646
  %v1648 = vpop.f32.mrf.mxu0
  %v1649 = vadd.f32 %v279, %v1648
  %1650 = vmatmul.bf16.gmra.mxu0 %v1129
  %v1651 = vpop.f32.mrf.mxu0
  %v1652 = vadd.f32 %v279, %v1651
  %v1653 = vpop.f32.mrf.mxu0
  %v1654 = vadd.f32 %v279, %v1653
  %1655 = vmatmul.bf16.gmra.mxu0 %v1132
  %v1656 = vpop.f32.mrf.mxu0
  %v1657 = vadd.f32 %v279, %v1656
  %v1658 = vpop.f32.mrf.mxu0
  %v1659 = vadd.f32 %v279, %v1658
  %1660 = vmatmul.bf16.gmra.mxu0 %v1135
  %v1661 = vpop.f32.mrf.mxu0
  %v1662 = vadd.f32 %v279, %v1661
  %v1663 = vpop.f32.mrf.mxu0
  %v1664 = vadd.f32 %v279, %v1663
  %1665 = vmatmul.bf16.gmra.mxu0 %v1138
  %v1666 = vpop.f32.mrf.mxu0
  %v1667 = vadd.f32 %v279, %v1666
  %v1668 = vpop.f32.mrf.mxu0
  %v1669 = vadd.f32 %v279, %v1668
  %1670 = vmatmul.bf16.gmra.mxu0 %v1141
  %v1671 = vpop.f32.mrf.mxu0
  %v1672 = vadd.f32 %v279, %v1671
  %v1673 = vpop.f32.mrf.mxu0
  %v1674 = vadd.f32 %v279, %v1673
  %1675 = vmatmul.bf16.gmra.mxu0 %v1144
  %v1676 = vpop.f32.mrf.mxu0
  %v1677 = vadd.f32 %v279, %v1676
  %v1678 = vpop.f32.mrf.mxu0
  %v1679 = vadd.f32 %v279, %v1678
  %1680 = vmatmul.bf16.gmra.mxu0 %v1147
  %v1681 = vpop.f32.mrf.mxu0
  %v1682 = vadd.f32 %v279, %v1681
  %v1683 = vpop.f32.mrf.mxu0
  %v1684 = vadd.f32 %v279, %v1683
  %1685 = vmatmul.bf16.gmra.mxu0 %v1150
  %v1686 = vpop.f32.mrf.mxu0
  %v1687 = vadd.f32 %v279, %v1686
  %v1688 = vpop.f32.mrf.mxu0
  %v1689 = vadd.f32 %v279, %v1688
  %1690 = vmatmul.bf16.gmra.mxu0 %v1153
  %v1691 = vpop.f32.mrf.mxu0
  %v1692 = vadd.f32 %v279, %v1691
  %v1693 = vpop.f32.mrf.mxu0
  %v1694 = vadd.f32 %v279, %v1693
  %1695 = vmatmul.bf16.gmra.mxu0 %v1156
  %v1696 = vpop.f32.mrf.mxu0
  %v1697 = vadd.f32 %v279, %v1696
  %v1698 = vpop.f32.mrf.mxu0
  %v1699 = vadd.f32 %v279, %v1698
  %1700 = vmatmul.bf16.gmra.mxu0 %v1159
  %v1701 = vpop.f32.mrf.mxu0
  %v1702 = vadd.f32 %v279, %v1701
  %v1703 = vpop.f32.mrf.mxu0
  %v1704 = vadd.f32 %v279, %v1703
  %1705 = vmatmul.bf16.gmra.mxu0 %v1162
  %v1706 = vpop.f32.mrf.mxu0
  %v1707 = vadd.f32 %v279, %v1706
  %v1708 = vpop.f32.mrf.mxu0
  %v1709 = vadd.f32 %v279, %v1708
  %1710 = vmatmul.bf16.gmra.mxu0 %v1165
  %v1711 = vpop.f32.mrf.mxu0
  %v1712 = vadd.f32 %v279, %v1711
  %v1713 = vpop.f32.mrf.mxu0
  %v1714 = vadd.f32 %v279, %v1713
  %1715 = vmatmul.bf16.gmra.mxu0 %v1168
  %v1716 = vpop.f32.mrf.mxu0
  %v1717 = vadd.f32 %v279, %v1716
  %v1718 = vpop.f32.mrf.mxu0
  %v1719 = vadd.f32 %v279, %v1718
  %1720 = vmatmul.bf16.gmra.mxu0 %v1171
  %v1721 = vpop.f32.mrf.mxu0
  %v1722 = vadd.f32 %v279, %v1721
  %v1723 = vpop.f32.mrf.mxu0
  %v1724 = vadd.f32 %v279, %v1723
  %1725 = vmatmul.bf16.gmra.mxu0 %v1174
  %v1726 = vpop.f32.mrf.mxu0
  %v1727 = vadd.f32 %v279, %v1726
  %v1728 = vpop.f32.mrf.mxu0
  %v1729 = vadd.f32 %v279, %v1728
  %1730 = vmatmul.bf16.gmra.mxu0 %v1177
  %v1731 = vpop.f32.mrf.mxu0
  %v1732 = vadd.f32 %v279, %v1731
  %v1733 = vpop.f32.mrf.mxu0
  %v1734 = vadd.f32 %v279, %v1733
  %1735 = vmatmul.bf16.gmra.mxu0 %v1180
  %v1736 = vpop.f32.mrf.mxu0
  %v1737 = vadd.f32 %v279, %v1736
  %v1738 = vpop.f32.mrf.mxu0
  %v1739 = vadd.f32 %v279, %v1738
  %1740 = vmatmul.bf16.gmra.mxu0 %v1183
  %v1741 = vpop.f32.mrf.mxu0
  %v1742 = vadd.f32 %v279, %v1741
  %v1743 = vpop.f32.mrf.mxu0
  %v1744 = vadd.f32 %v279, %v1743
  %1745 = vmatmul.bf16.gmra.mxu0 %v1186
  %v1746 = vpop.f32.mrf.mxu0
  %v1747 = vadd.f32 %v279, %v1746
  %v1748 = vpop.f32.mrf.mxu0
  %v1749 = vadd.f32 %v279, %v1748
  %1750 = vmatmul.bf16.gmra.mxu0 %v1189
  %v1751 = vpop.f32.mrf.mxu0
  %v1752 = vadd.f32 %v279, %v1751
  %v1753 = vpop.f32.mrf.mxu0
  %v1754 = vadd.f32 %v279, %v1753
  %1755 = vmatmul.bf16.gmra.mxu0 %v1192
  %v1756 = vpop.f32.mrf.mxu0
  %v1757 = vadd.f32 %v279, %v1756
  %v1758 = vpop.f32.mrf.mxu0
  %v1759 = vadd.f32 %v279, %v1758
  %1760 = vmatmul.bf16.gmra.mxu0 %v1195
  %v1761 = vpop.f32.mrf.mxu0
  %v1762 = vadd.f32 %v279, %v1761
  %v1763 = vpop.f32.mrf.mxu0
  %v1764 = vadd.f32 %v279, %v1763
  %1765 = vmatmul.bf16.gmra.mxu0 %v1198
  %v1766 = vpop.f32.mrf.mxu0
  %v1767 = vadd.f32 %v279, %v1766
  %v1768 = vpop.f32.mrf.mxu0
  %v1769 = vadd.f32 %v279, %v1768
  %1770 = vmatmul.bf16.gmra.mxu0 %v1201
  %v1771 = vpop.f32.mrf.mxu0
  %v1772 = vadd.f32 %v279, %v1771
  %v1773 = vpop.f32.mrf.mxu0
  %v1774 = vadd.f32 %v279, %v1773
  %1775 = vmatmul.bf16.gmra.mxu0 %v1204
  %v1776 = vpop.f32.mrf.mxu0
  %v1777 = vadd.f32 %v279, %v1776
  %v1778 = vpop.f32.mrf.mxu0
  %v1779 = vadd.f32 %v279, %v1778
  %1780 = vmatmul.bf16.gmra.mxu0 %v1207
  %v1781 = vpop.f32.mrf.mxu0
  %v1782 = vadd.f32 %v279, %v1781
  %v1783 = vpop.f32.mrf.mxu0
  %v1784 = vadd.f32 %v279, %v1783
  %1785 = vmatmul.bf16.gmra.mxu0 %v1210
  %v1786 = vpop.f32.mrf.mxu0
  %v1787 = vadd.f32 %v279, %v1786
  %v1788 = vpop.f32.mrf.mxu0
  %v1789 = vadd.f32 %v279, %v1788
  %1790 = vmatmul.bf16.gmra.mxu0 %v1213
  %v1791 = vpop.f32.mrf.mxu0
  %v1792 = vadd.f32 %v279, %v1791
  %v1793 = vpop.f32.mrf.mxu0
  %v1794 = vadd.f32 %v279, %v1793
  %1795 = vmatmul.bf16.gmra.mxu0 %v1216
  %v1796 = vpop.f32.mrf.mxu0
  %v1797 = vadd.f32 %v279, %v1796
  %v1798 = vpop.f32.mrf.mxu0
  %v1799 = vadd.f32 %v279, %v1798
  %1800 = vmatmul.bf16.gmra.mxu0 %v1219
  %v1801 = vpop.f32.mrf.mxu0
  %v1802 = vadd.f32 %v279, %v1801
  %v1803 = vpop.f32.mrf.mxu0
  %v1804 = vadd.f32 %v279, %v1803
  %1805 = vmatmul.bf16.gmra.mxu0 %v1222
  %v1806 = vpop.f32.mrf.mxu0
  %v1807 = vadd.f32 %v279, %v1806
  %v1808 = vpop.f32.mrf.mxu0
  %v1809 = vadd.f32 %v279, %v1808
  %1810 = vmatmul.bf16.gmra.mxu0 %v1225
  %v1811 = vpop.f32.mrf.mxu0
  %v1812 = vadd.f32 %v279, %v1811
  %v1813 = vpop.f32.mrf.mxu0
  %v1814 = vadd.f32 %v279, %v1813
  %1815 = vmatmul.bf16.gmra.mxu0 %v1228
  %v1816 = vpop.f32.mrf.mxu0
  %v1817 = vadd.f32 %v279, %v1816
  %v1818 = vpop.f32.mrf.mxu0
  %v1819 = vadd.f32 %v279, %v1818
  %1820 = vmatmul.bf16.gmra.mxu0 %v1231
  %v1821 = vpop.f32.mrf.mxu0
  %v1822 = vadd.f32 %v279, %v1821
  %v1823 = vpop.f32.mrf.mxu0
  %v1824 = vadd.f32 %v279, %v1823
  %1825 = vmatmul.bf16.gmra.mxu0 %v1234
  %v1826 = vpop.f32.mrf.mxu0
  %v1827 = vadd.f32 %v279, %v1826
  %v1828 = vpop.f32.mrf.mxu0
  %v1829 = vadd.f32 %v279, %v1828
  %1830 = vmatmul.bf16.gmra.mxu0 %v1237
  %v1831 = vpop.f32.mrf.mxu0
  %v1832 = vadd.f32 %v279, %v1831
  %v1833 = vpop.f32.mrf.mxu0
  %v1834 = vadd.f32 %v279, %v1833
  %1835 = vmatmul.bf16.gmra.mxu0 %v1240
  %v1836 = vpop.f32.mrf.mxu0
  %v1837 = vadd.f32 %v279, %v1836
  %v1838 = vpop.f32.mrf.mxu0
  %v1839 = vadd.f32 %v279, %v1838
  %1840 = vmatmul.bf16.gmra.mxu0 %v1243
  %v1841 = vpop.f32.mrf.mxu0
  %v1842 = vadd.f32 %v279, %v1841
  %v1843 = vpop.f32.mrf.mxu0
  %v1844 = vadd.f32 %v279, %v1843
  %1845 = vmatmul.bf16.gmra.mxu0 %v1246
  %v1846 = vpop.f32.mrf.mxu0
  %v1847 = vadd.f32 %v279, %v1846
  %v1848 = vpop.f32.mrf.mxu0
  %v1849 = vadd.f32 %v279, %v1848
  %1850 = vmatmul.bf16.gmra.mxu0 %v1249
  %v1851 = vpop.f32.mrf.mxu0
  %v1852 = vadd.f32 %v279, %v1851
  %v1853 = vpop.f32.mrf.mxu0
  %v1854 = vadd.f32 %v279, %v1853
  %1855 = vmatmul.bf16.gmra.mxu0 %v1252
  %v1856 = vpop.f32.mrf.mxu0
  %v1857 = vadd.f32 %v279, %v1856
  %v1858 = vpop.f32.mrf.mxu0
  %v1859 = vadd.f32 %v279, %v1858
  %1860 = vmatmul.bf16.gmra.mxu0 %v1255
  %v1861 = vpop.f32.mrf.mxu0
  %v1862 = vadd.f32 %v279, %v1861
  %v1863 = vpop.f32.mrf.mxu0
  %v1864 = vadd.f32 %v279, %v1863
  %1865 = vmatmul.bf16.gmra.mxu0 %v1258
  %v1866 = vpop.f32.mrf.mxu0
  %v1867 = vadd.f32 %v279, %v1866
  %v1868 = vpop.f32.mrf.mxu0
  %v1869 = vadd.f32 %v279, %v1868
  %1870 = vmatmul.bf16.gmra.mxu0 %v1261
  %v1871 = vpop.f32.mrf.mxu0
  %v1872 = vadd.f32 %v279, %v1871
  %v1873 = vpop.f32.mrf.mxu0
  %v1874 = vadd.f32 %v279, %v1873
  %1875 = vmatmul.bf16.gmra.mxu0 %v1264
  %v1876 = vpop.f32.mrf.mxu0
  %v1877 = vadd.f32 %v279, %v1876
  %v1878 = vpop.f32.mrf.mxu0
  %v1879 = vadd.f32 %v279, %v1878
  %1880 = vmatmul.bf16.gmra.mxu0 %v1267
  %v1881 = vpop.f32.mrf.mxu0
  %v1882 = vadd.f32 %v279, %v1881
  %v1883 = vpop.f32.mrf.mxu0
  %v1884 = vadd.f32 %v279, %v1883
  %1885 = vmatmul.bf16.gmra.mxu0 %v1270
  %v1886 = vpop.f32.mrf.mxu0
  %v1887 = vadd.f32 %v279, %v1886
  %v1888 = vpop.f32.mrf.mxu0
  %v1889 = vadd.f32 %v279, %v1888
  %1890 = vmatmul.bf16.gmra.mxu0 %v1273
  %v1891 = vpop.f32.mrf.mxu0
  %v1892 = vadd.f32 %v279, %v1891
  %v1893 = vpop.f32.mrf.mxu0
  %v1894 = vadd.f32 %v279, %v1893
  %1895 = vmatmul.bf16.gmra.mxu0 %v1276
  %v1896 = vpop.f32.mrf.mxu0
  %v1897 = vadd.f32 %v279, %v1896
  %v1898 = vpop.f32.mrf.mxu0
  %v1899 = vadd.f32 %v279, %v1898
  %1900 = vmatmul.bf16.gmra.mxu0 %v1279
  %v1901 = vpop.f32.mrf.mxu0
  %v1902 = vadd.f32 %v279, %v1901
  %v1903 = vpop.f32.mrf.mxu0
  %v1904 = vadd.f32 %v279, %v1903
  %1905 = vmatmul.bf16.gmra.mxu0 %v1282
  %v1906 = vpop.f32.mrf.mxu0
  %v1907 = vadd.f32 %v279, %v1906
  %v1908 = vpop.f32.mrf.mxu0
  %v1909 = vadd.f32 %v279, %v1908
  %1910 = vmatmul.bf16.gmra.mxu0 %v1285
  %v1911 = vpop.f32.mrf.mxu0
  %v1912 = vadd.f32 %v279, %v1911
  %v1913 = vpop.f32.mrf.mxu0
  %v1914 = vadd.f32 %v279, %v1913
  %1915 = vmatmul.bf16.gmra.mxu0 %v1288
  %v1916 = vpop.f32.mrf.mxu0
  %v1917 = vadd.f32 %v279, %v1916
  %v1918 = vpop.f32.mrf.mxu0
  %v1919 = vadd.f32 %v279, %v1918
  %1920 = vmatmul.bf16.gmra.mxu0 %v1291
  %v1921 = vpop.f32.mrf.mxu0
  %v1922 = vadd.f32 %v279, %v1921
  %v1923 = vpop.f32.mrf.mxu0
  %v1924 = vadd.f32 %v279, %v1923
  %1925 = vmatmul.bf16.gmra.mxu0 %v1294
  %v1926 = vpop.f32.mrf.mxu0
  %v1927 = vadd.f32 %v279, %v1926
  %v1928 = vpop.f32.mrf.mxu0
  %v1929 = vadd.f32 %v279, %v1928
  %1930 = vmatmul.bf16.gmra.mxu0 %v1297
  %v1931 = vpop.f32.mrf.mxu0
  %v1932 = vadd.f32 %v279, %v1931
  %v1933 = vpop.f32.mrf.mxu0
  %v1934 = vadd.f32 %v279, %v1933
  %1935 = vmatmul.bf16.gmra.mxu0 %v1300
  %v1936 = vpop.f32.mrf.mxu0
  %v1937 = vadd.f32 %v279, %v1936
  %v1938 = vpop.f32.mrf.mxu0
  %v1939 = vadd.f32 %v279, %v1938
  %1940 = vmatmul.bf16.gmra.mxu0 %v1303
  %v1941 = vpop.f32.mrf.mxu0
  %v1942 = vadd.f32 %v279, %v1941
  %v1943 = vpop.f32.mrf.mxu0
  %v1944 = vadd.f32 %v279, %v1943
  %1945 = vmatmul.bf16.gmra.mxu0 %v1306
  %v1946 = vpop.f32.mrf.mxu0
  %v1947 = vadd.f32 %v279, %v1946
  %v1948 = vpop.f32.mrf.mxu0
  %v1949 = vadd.f32 %v279, %v1948
  %1950 = vmatmul.bf16.gmra.mxu0 %v1309
  %v1951 = vpop.f32.mrf.mxu0
  %v1952 = vadd.f32 %v279, %v1951
  %v1953 = vpop.f32.mrf.mxu0
  %v1954 = vadd.f32 %v279, %v1953
  %1955 = vmatmul.bf16.gmra.mxu0 %v1312
  %v1956 = vpop.f32.mrf.mxu0
  %v1957 = vadd.f32 %v279, %v1956
  %v1958 = vpop.f32.mrf.mxu0
  %v1959 = vadd.f32 %v279, %v1958
  %1960 = vmatmul.bf16.gmra.mxu0 %v1315
  %v1961 = vpop.f32.mrf.mxu0
  %v1962 = vadd.f32 %v279, %v1961
  %v1963 = vpop.f32.mrf.mxu0
  %v1964 = vadd.f32 %v279, %v1963
  %1965 = vdwg.mxu0
  %v1966 = vmax.f32 %v1327, 0.0
  %v1967 = vmax.f32 %v1329, 0.0
  %v1968 = vmax.f32 %v1332, 0.0
  %v1969 = vmax.f32 %v1334, 0.0
  %v1970 = vmax.f32 %v1337, 0.0
  %v1971 = vmax.f32 %v1339, 0.0
  %v1972 = vmax.f32 %v1342, 0.0
  %v1973 = vmax.f32 %v1344, 0.0
  %v1974 = vmax.f32 %v1347, 0.0
  %v1975 = vmax.f32 %v1349, 0.0
  %v1976 = vmax.f32 %v1352, 0.0
  %v1977 = vmax.f32 %v1354, 0.0
  %v1978 = vmax.f32 %v1357, 0.0
  %v1979 = vmax.f32 %v1359, 0.0
  %v1980 = vmax.f32 %v1362, 0.0
  %v1981 = vmax.f32 %v1364, 0.0
  %v1982 = vmax.f32 %v1367, 0.0
  %v1983 = vmax.f32 %v1369, 0.0
  %v1984 = vmax.f32 %v1372, 0.0
  %v1985 = vmax.f32 %v1374, 0.0
  %v1986 = vmax.f32 %v1377, 0.0
  %v1987 = vmax.f32 %v1379, 0.0
  %v1988 = vmax.f32 %v1382, 0.0
  %v1989 = vmax.f32 %v1384, 0.0
  %v1990 = vmax.f32 %v1387, 0.0
  %v1991 = vmax.f32 %v1389, 0.0
  %v1992 = vmax.f32 %v1392, 0.0
  %v1993 = vmax.f32 %v1394, 0.0
  %v1994 = vmax.f32 %v1397, 0.0
  %v1995 = vmax.f32 %v1399, 0.0
  %v1996 = vmax.f32 %v1402, 0.0
  %v1997 = vmax.f32 %v1404, 0.0
  %v1998 = vmax.f32 %v1407, 0.0
  %v1999 = vmax.f32 %v1409, 0.0
  %v2000 = vmax.f32 %v1412, 0.0
  %v2001 = vmax.f32 %v1414, 0.0
  %v2002 = vmax.f32 %v1417, 0.0
  %v2003 = vmax.f32 %v1419, 0.0
  %v2004 = vmax.f32 %v1422, 0.0
  %v2005 = vmax.f32 %v1424, 0.0
  %v2006 = vmax.f32 %v1427, 0.0
  %v2007 = vmax.f32 %v1429, 0.0
  %v2008 = vmax.f32 %v1432, 0.0
  %v2009 = vmax.f32 %v1434, 0.0
  %v2010 = vmax.f32 %v1437, 0.0
  %v2011 = vmax.f32 %v1439, 0.0
  %v2012 = vmax.f32 %v1442, 0.0
  %v2013 = vmax.f32 %v1444, 0.0
  %v2014 = vmax.f32 %v1447, 0.0
  %v2015 = vmax.f32 %v1449, 0.0
  %v2016 = vmax.f32 %v1452, 0.0
  %v2017 = vmax.f32 %v1454, 0.0
  %v2018 = vmax.f32 %v1457, 0.0
  %v2019 = vmax.f32 %v1459, 0.0
  %v2020 = vmax.f32 %v1462, 0.0
  %v2021 = vmax.f32 %v1464, 0.0
  %v2022 = vmax.f32 %v1467, 0.0
  %v2023 = vmax.f32 %v1469, 0.0
  %v2024 = vmax.f32 %v1472, 0.0
  %v2025 = vmax.f32 %v1474, 0.0
  %v2026 = vmax.f32 %v1477, 0.0
  %v2027 = vmax.f32 %v1479, 0.0
  %v2028 = vmax.f32 %v1482, 0.0
  %v2029 = vmax.f32 %v1484, 0.0
  %v2030 = vmax.f32 %v1487, 0.0
  %v2031 = vmax.f32 %v1489, 0.0
  %v2032 = vmax.f32 %v1492, 0.0
  %v2033 = vmax.f32 %v1494, 0.0
  %v2034 = vmax.f32 %v1497, 0.0
  %v2035 = vmax.f32 %v1499, 0.0
  %v2036 = vmax.f32 %v1502, 0.0
  %v2037 = vmax.f32 %v1504, 0.0
  %v2038 = vmax.f32 %v1507, 0.0
  %v2039 = vmax.f32 %v1509, 0.0
  %v2040 = vmax.f32 %v1512, 0.0
  %v2041 = vmax.f32 %v1514, 0.0
  %v2042 = vmax.f32 %v1517, 0.0
  %v2043 = vmax.f32 %v1519, 0.0
  %v2044 = vmax.f32 %v1522, 0.0
  %v2045 = vmax.f32 %v1524, 0.0
  %v2046 = vmax.f32 %v1527, 0.0
  %v2047 = vmax.f32 %v1529, 0.0
  %v2048 = vmax.f32 %v1532, 0.0
  %v2049 = vmax.f32 %v1534, 0.0
  %v2050 = vmax.f32 %v1537, 0.0
  %v2051 = vmax.f32 %v1539, 0.0
  %v2052 = vmax.f32 %v1542, 0.0
  %v2053 = vmax.f32 %v1544, 0.0
  %v2054 = vmax.f32 %v1547, 0.0
  %v2055 = vmax.f32 %v1549, 0.0
  %v2056 = vmax.f32 %v1552, 0.0
  %v2057 = vmax.f32 %v1554, 0.0
  %v2058 = vmax.f32 %v1557, 0.0
  %v2059 = vmax.f32 %v1559, 0.0
  %v2060 = vmax.f32 %v1562, 0.0
  %v2061 = vmax.f32 %v1564, 0.0
  %v2062 = vmax.f32 %v1567, 0.0
  %v2063 = vmax.f32 %v1569, 0.0
  %v2064 = vmax.f32 %v1572, 0.0
  %v2065 = vmax.f32 %v1574, 0.0
  %v2066 = vmax.f32 %v1577, 0.0
  %v2067 = vmax.f32 %v1579, 0.0
  %v2068 = vmax.f32 %v1582, 0.0
  %v2069 = vmax.f32 %v1584, 0.0
  %v2070 = vmax.f32 %v1587, 0.0
  %v2071 = vmax.f32 %v1589, 0.0
  %v2072 = vmax.f32 %v1592, 0.0
  %v2073 = vmax.f32 %v1594, 0.0
  %v2074 = vmax.f32 %v1597, 0.0
  %v2075 = vmax.f32 %v1599, 0.0
  %v2076 = vmax.f32 %v1602, 0.0
  %v2077 = vmax.f32 %v1604, 0.0
  %v2078 = vmax.f32 %v1607, 0.0
  %v2079 = vmax.f32 %v1609, 0.0
  %v2080 = vmax.f32 %v1612, 0.0
  %v2081 = vmax.f32 %v1614, 0.0
  %v2082 = vmax.f32 %v1617, 0.0
  %v2083 = vmax.f32 %v1619, 0.0
  %v2084 = vmax.f32 %v1622, 0.0
  %v2085 = vmax.f32 %v1624, 0.0
  %v2086 = vmax.f32 %v1627, 0.0
  %v2087 = vmax.f32 %v1629, 0.0
  %v2088 = vmax.f32 %v1632, 0.0
  %v2089 = vmax.f32 %v1634, 0.0
  %v2090 = vmax.f32 %v1637, 0.0
  %v2091 = vmax.f32 %v1639, 0.0
  %v2092 = vmax.f32 %v1642, 0.0
  %v2093 = vmax.f32 %v1644, 0.0
  %v2094 = vmax.f32 %v1647, 0.0
  %v2095 = vmax.f32 %v1649, 0.0
  %v2096 = vmax.f32 %v1652, 0.0
  %v2097 = vmax.f32 %v1654, 0.0
  %v2098 = vmax.f32 %v1657, 0.0
  %v2099 = vmax.f32 %v1659, 0.0
  %v2100 = vmax.f32 %v1662, 0.0
  %v2101 = vmax.f32 %v1664, 0.0
  %v2102 = vmax.f32 %v1667, 0.0
  %v2103 = vmax.f32 %v1669, 0.0
  %v2104 = vmax.f32 %v1672, 0.0
  %v2105 = vmax.f32 %v1674, 0.0
  %v2106 = vmax.f32 %v1677, 0.0
  %v2107 = vmax.f32 %v1679, 0.0
  %v2108 = vmax.f32 %v1682, 0.0
  %v2109 = vmax.f32 %v1684, 0.0
  %v2110 = vmax.f32 %v1687, 0.0
  %v2111 = vmax.f32 %v1689, 0.0
  %v2112 = vmax.f32 %v1692, 0.0
  %v2113 = vmax.f32 %v1694, 0.0
  %v2114 = vmax.f32 %v1697, 0.0
  %v2115 = vmax.f32 %v1699, 0.0
  %v2116 = vmax.f32 %v1702, 0.0
  %v2117 = vmax.f32 %v1704, 0.0
  %v2118 = vmax.f32 %v1707, 0.0
  %v2119 = vmax.f32 %v1709, 0.0
  %v2120 = vmax.f32 %v1712, 0.0
  %v2121 = vmax.f32 %v1714, 0.0
  %v2122 = vmax.f32 %v1717, 0.0
  %v2123 = vmax.f32 %v1719, 0.0
  %v2124 = vmax.f32 %v1722, 0.0
  %v2125 = vmax.f32 %v1724, 0.0
  %v2126 = vmax.f32 %v1727, 0.0
  %v2127 = vmax.f32 %v1729, 0.0
  %v2128 = vmax.f32 %v1732, 0.0
  %v2129 = vmax.f32 %v1734, 0.0
  %v2130 = vmax.f32 %v1737, 0.0
  %v2131 = vmax.f32 %v1739, 0.0
  %v2132 = vmax.f32 %v1742, 0.0
  %v2133 = vmax.f32 %v1744, 0.0
  %v2134 = vmax.f32 %v1747, 0.0
  %v2135 = vmax.f32 %v1749, 0.0
  %v2136 = vmax.f32 %v1752, 0.0
  %v2137 = vmax.f32 %v1754, 0.0
  %v2138 = vmax.f32 %v1757, 0.0
  %v2139 = vmax.f32 %v1759, 0.0
  %v2140 = vmax.f32 %v1762, 0.0
  %v2141 = vmax.f32 %v1764, 0.0
  %v2142 = vmax.f32 %v1767, 0.0
  %v2143 = vmax.f32 %v1769, 0.0
  %v2144 = vmax.f32 %v1772, 0.0
  %v2145 = vmax.f32 %v1774, 0.0
  %v2146 = vmax.f32 %v1777, 0.0
  %v2147 = vmax.f32 %v1779, 0.0
  %v2148 = vmax.f32 %v1782, 0.0
  %v2149 = vmax.f32 %v1784, 0.0
  %v2150 = vmax.f32 %v1787, 0.0
  %v2151 = vmax.f32 %v1789, 0.0
  %v2152 = vmax.f32 %v1792, 0.0
  %v2153 = vmax.f32 %v1794, 0.0
  %v2154 = vmax.f32 %v1797, 0.0
  %v2155 = vmax.f32 %v1799, 0.0
  %v2156 = vmax.f32 %v1802, 0.0
  %v2157 = vmax.f32 %v1804, 0.0
  %v2158 = vmax.f32 %v1807, 0.0
  %v2159 = vmax.f32 %v1809, 0.0
  %v2160 = vmax.f32 %v1812, 0.0
  %v2161 = vmax.f32 %v1814, 0.0
  %v2162 = vmax.f32 %v1817, 0.0
  %v2163 = vmax.f32 %v1819, 0.0
  %v2164 = vmax.f32 %v1822, 0.0
  %v2165 = vmax.f32 %v1824, 0.0
  %v2166 = vmax.f32 %v1827, 0.0
  %v2167 = vmax.f32 %v1829, 0.0
  %v2168 = vmax.f32 %v1832, 0.0
  %v2169 = vmax.f32 %v1834, 0.0
  %v2170 = vmax.f32 %v1837, 0.0
  %v2171 = vmax.f32 %v1839, 0.0
  %v2172 = vmax.f32 %v1842, 0.0
  %v2173 = vmax.f32 %v1844, 0.0
  %v2174 = vmax.f32 %v1847, 0.0
  %v2175 = vmax.f32 %v1849, 0.0
  %v2176 = vmax.f32 %v1852, 0.0
  %v2177 = vmax.f32 %v1854, 0.0
  %v2178 = vmax.f32 %v1857, 0.0
  %v2179 = vmax.f32 %v1859, 0.0
  %v2180 = vmax.f32 %v1862, 0.0
  %v2181 = vmax.f32 %v1864, 0.0
  %v2182 = vmax.f32 %v1867, 0.0
  %v2183 = vmax.f32 %v1869, 0.0
  %v2184 = vmax.f32 %v1872, 0.0
  %v2185 = vmax.f32 %v1874, 0.0
  %v2186 = vmax.f32 %v1877, 0.0
  %v2187 = vmax.f32 %v1879, 0.0
  %v2188 = vmax.f32 %v1882, 0.0
  %v2189 = vmax.f32 %v1884, 0.0
  %v2190 = vmax.f32 %v1887, 0.0
  %v2191 = vmax.f32 %v1889, 0.0
  %v2192 = vmax.f32 %v1892, 0.0
  %v2193 = vmax.f32 %v1894, 0.0
  %v2194 = vmax.f32 %v1897, 0.0
  %v2195 = vmax.f32 %v1899, 0.0
  %v2196 = vmax.f32 %v1902, 0.0
  %v2197 = vmax.f32 %v1904, 0.0
  %v2198 = vmax.f32 %v1907, 0.0
  %v2199 = vmax.f32 %v1909, 0.0
  %v2200 = vmax.f32 %v1912, 0.0
  %v2201 = vmax.f32 %v1914, 0.0
  %v2202 = vmax.f32 %v1917, 0.0
  %v2203 = vmax.f32 %v1919, 0.0
  %v2204 = vmax.f32 %v1922, 0.0
  %v2205 = vmax.f32 %v1924, 0.0
  %v2206 = vmax.f32 %v1927, 0.0
  %v2207 = vmax.f32 %v1929, 0.0
  %v2208 = vmax.f32 %v1932, 0.0
  %v2209 = vmax.f32 %v1934, 0.0
  %v2210 = vmax.f32 %v1937, 0.0
  %v2211 = vmax.f32 %v1939, 0.0
  %v2212 = vmax.f32 %v1942, 0.0
  %v2213 = vmax.f32 %v1944, 0.0
  %v2214 = vmax.f32 %v1947, 0.0
  %v2215 = vmax.f32 %v1949, 0.0
  %v2216 = vmax.f32 %v1952, 0.0
  %v2217 = vmax.f32 %v1954, 0.0
  %v2218 = vmax.f32 %v1957, 0.0
  %v2219 = vmax.f32 %v1959, 0.0
  %v2220 = vmax.f32 %v1962, 0.0
  %v2221 = vmax.f32 %v1964, 0.0
  %v2222 = vadd.f32 %v1966, %v1967
  %v2223 = vadd.f32 %v2222, %v1968
  %v2224 = vadd.f32 %v2223, %v1969
  %v2225 = vadd.f32 %v2224, %v1970
  %v2226 = vadd.f32 %v2225, %v1971
  %v2227 = vadd.f32 %v2226, %v1972
  %v2228 = vadd.f32 %v2227, %v1973
  %v2229 = vadd.f32 %v2228, %v1974
  %v2230 = vadd.f32 %v2229, %v1975
  %v2231 = vadd.f32 %v2230, %v1976
  %v2232 = vadd.f32 %v2231, %v1977
  %v2233 = vadd.f32 %v2232, %v1978
  %v2234 = vadd.f32 %v2233, %v1979
  %v2235 = vadd.f32 %v2234, %v1980
  %v2236 = vadd.f32 %v2235, %v1981
  %v2237 = vadd.f32 %v2236, %v1982
  %v2238 = vadd.f32 %v2237, %v1983
  %v2239 = vadd.f32 %v2238, %v1984
  %v2240 = vadd.f32 %v2239, %v1985
  %v2241 = vadd.f32 %v2240, %v1986
  %v2242 = vadd.f32 %v2241, %v1987
  %v2243 = vadd.f32 %v2242, %v1988
  %v2244 = vadd.f32 %v2243, %v1989
  %v2245 = vadd.f32 %v2244, %v1990
  %v2246 = vadd.f32 %v2245, %v1991
  %v2247 = vadd.f32 %v2246, %v1992
  %v2248 = vadd.f32 %v2247, %v1993
  %v2249 = vadd.f32 %v2248, %v1994
  %v2250 = vadd.f32 %v2249, %v1995
  %v2251 = vadd.f32 %v2250, %v1996
  %v2252 = vadd.f32 %v2251, %v1997
  %v2253 = vadd.f32 %v2252, %v1998
  %v2254 = vadd.f32 %v2253, %v1999
  %v2255 = vadd.f32 %v2254, %v2000
  %v2256 = vadd.f32 %v2255, %v2001
  %v2257 = vadd.f32 %v2256, %v2002
  %v2258 = vadd.f32 %v2257, %v2003
  %v2259 = vadd.f32 %v2258, %v2004
  %v2260 = vadd.f32 %v2259, %v2005
  %v2261 = vadd.f32 %v2260, %v2006
  %v2262 = vadd.f32 %v2261, %v2007
  %v2263 = vadd.f32 %v2262, %v2008
  %v2264 = vadd.f32 %v2263, %v2009
  %v2265 = vadd.f32 %v2264, %v2010
  %v2266 = vadd.f32 %v2265, %v2011
  %v2267 = vadd.f32 %v2266, %v2012
  %v2268 = vadd.f32 %v2267, %v2013
  %v2269 = vadd.f32 %v2268, %v2014
  %v2270 = vadd.f32 %v2269, %v2015
  %v2271 = vadd.f32 %v2270, %v2016
  %v2272 = vadd.f32 %v2271, %v2017
  %v2273 = vadd.f32 %v2272, %v2018
  %v2274 = vadd.f32 %v2273, %v2019
  %v2275 = vadd.f32 %v2274, %v2020
  %v2276 = vadd.f32 %v2275, %v2021
  %v2277 = vadd.f32 %v2276, %v2022
  %v2278 = vadd.f32 %v2277, %v2023
  %v2279 = vadd.f32 %v2278, %v2024
  %v2280 = vadd.f32 %v2279, %v2025
  %v2281 = vadd.f32 %v2280, %v2026
  %v2282 = vadd.f32 %v2281, %v2027
  %v2283 = vadd.f32 %v2282, %v2028
  %v2284 = vadd.f32 %v2283, %v2029
  %v2285 = vadd.f32 %v2284, %v2030
  %v2286 = vadd.f32 %v2285, %v2031
  %v2287 = vadd.f32 %v2286, %v2032
  %v2288 = vadd.f32 %v2287, %v2033
  %v2289 = vadd.f32 %v2288, %v2034
  %v2290 = vadd.f32 %v2289, %v2035
  %v2291 = vadd.f32 %v2290, %v2036
  %v2292 = vadd.f32 %v2291, %v2037
  %v2293 = vadd.f32 %v2292, %v2038
  %v2294 = vadd.f32 %v2293, %v2039
  %v2295 = vadd.f32 %v2294, %v2040
  %v2296 = vadd.f32 %v2295, %v2041
  %v2297 = vadd.f32 %v2296, %v2042
  %v2298 = vadd.f32 %v2297, %v2043
  %v2299 = vadd.f32 %v2298, %v2044
  %v2300 = vadd.f32 %v2299, %v2045
  %v2301 = vadd.f32 %v2300, %v2046
  %v2302 = vadd.f32 %v2301, %v2047
  %v2303 = vadd.f32 %v2302, %v2048
  %v2304 = vadd.f32 %v2303, %v2049
  %v2305 = vadd.f32 %v2304, %v2050
  %v2306 = vadd.f32 %v2305, %v2051
  %v2307 = vadd.f32 %v2306, %v2052
  %v2308 = vadd.f32 %v2307, %v2053
  %v2309 = vadd.f32 %v2308, %v2054
  %v2310 = vadd.f32 %v2309, %v2055
  %v2311 = vadd.f32 %v2310, %v2056
  %v2312 = vadd.f32 %v2311, %v2057
  %v2313 = vadd.f32 %v2312, %v2058
  %v2314 = vadd.f32 %v2313, %v2059
  %v2315 = vadd.f32 %v2314, %v2060
  %v2316 = vadd.f32 %v2315, %v2061
  %v2317 = vadd.f32 %v2316, %v2062
  %v2318 = vadd.f32 %v2317, %v2063
  %v2319 = vadd.f32 %v2318, %v2064
  %v2320 = vadd.f32 %v2319, %v2065
  %v2321 = vadd.f32 %v2320, %v2066
  %v2322 = vadd.f32 %v2321, %v2067
  %v2323 = vadd.f32 %v2322, %v2068
  %v2324 = vadd.f32 %v2323, %v2069
  %v2325 = vadd.f32 %v2324, %v2070
  %v2326 = vadd.f32 %v2325, %v2071
  %v2327 = vadd.f32 %v2326, %v2072
  %v2328 = vadd.f32 %v2327, %v2073
  %v2329 = vadd.f32 %v2328, %v2074
  %v2330 = vadd.f32 %v2329, %v2075
  %v2331 = vadd.f32 %v2330, %v2076
  %v2332 = vadd.f32 %v2331, %v2077
  %v2333 = vadd.f32 %v2332, %v2078
  %v2334 = vadd.f32 %v2333, %v2079
  %v2335 = vadd.f32 %v2334, %v2080
  %v2336 = vadd.f32 %v2335, %v2081
  %v2337 = vadd.f32 %v2336, %v2082
  %v2338 = vadd.f32 %v2337, %v2083
  %v2339 = vadd.f32 %v2338, %v2084
  %v2340 = vadd.f32 %v2339, %v2085
  %v2341 = vadd.f32 %v2340, %v2086
  %v2342 = vadd.f32 %v2341, %v2087
  %v2343 = vadd.f32 %v2342, %v2088
  %v2344 = vadd.f32 %v2343, %v2089
  %v2345 = vadd.f32 %v2344, %v2090
  %v2346 = vadd.f32 %v2345, %v2091
  %v2347 = vadd.f32 %v2346, %v2092
  %v2348 = vadd.f32 %v2347, %v2093
  %v2349 = vrot.slane %v2348, 4
  %v2350 = vadd.f32 %v2348, %v2349
  %v2351 = vrot.slane %v2350, 2
  %v2352 = vadd.f32 %v2350, %v2351
  %v2353 = vrot.slane %v2352, 1
  %v2354 = vadd.f32 %v2352, %v2353
  %v2355 = vadd.f32 %v2094, %v2095
  %v2356 = vadd.f32 %v2355, %v2096
  %v2357 = vadd.f32 %v2356, %v2097
  %v2358 = vadd.f32 %v2357, %v2098
  %v2359 = vadd.f32 %v2358, %v2099
  %v2360 = vadd.f32 %v2359, %v2100
  %v2361 = vadd.f32 %v2360, %v2101
  %v2362 = vadd.f32 %v2361, %v2102
  %v2363 = vadd.f32 %v2362, %v2103
  %v2364 = vadd.f32 %v2363, %v2104
  %v2365 = vadd.f32 %v2364, %v2105
  %v2366 = vadd.f32 %v2365, %v2106
  %v2367 = vadd.f32 %v2366, %v2107
  %v2368 = vadd.f32 %v2367, %v2108
  %v2369 = vadd.f32 %v2368, %v2109
  %v2370 = vadd.f32 %v2369, %v2110
  %v2371 = vadd.f32 %v2370, %v2111
  %v2372 = vadd.f32 %v2371, %v2112
  %v2373 = vadd.f32 %v2372, %v2113
  %v2374 = vadd.f32 %v2373, %v2114
  %v2375 = vadd.f32 %v2374, %v2115
  %v2376 = vadd.f32 %v2375, %v2116
  %v2377 = vadd.f32 %v2376, %v2117
  %v2378 = vadd.f32 %v2377, %v2118
  %v2379 = vadd.f32 %v2378, %v2119
  %v2380 = vadd.f32 %v2379, %v2120
  %v2381 = vadd.f32 %v2380, %v2121
  %v2382 = vadd.f32 %v2381, %v2122
  %v2383 = vadd.f32 %v2382, %v2123
  %v2384 = vadd.f32 %v2383, %v2124
  %v2385 = vadd.f32 %v2384, %v2125
  %v2386 = vadd.f32 %v2385, %v2126
  %v2387 = vadd.f32 %v2386, %v2127
  %v2388 = vadd.f32 %v2387, %v2128
  %v2389 = vadd.f32 %v2388, %v2129
  %v2390 = vadd.f32 %v2389, %v2130
  %v2391 = vadd.f32 %v2390, %v2131
  %v2392 = vadd.f32 %v2391, %v2132
  %v2393 = vadd.f32 %v2392, %v2133
  %v2394 = vadd.f32 %v2393, %v2134
  %v2395 = vadd.f32 %v2394, %v2135
  %v2396 = vadd.f32 %v2395, %v2136
  %v2397 = vadd.f32 %v2396, %v2137
  %v2398 = vadd.f32 %v2397, %v2138
  %v2399 = vadd.f32 %v2398, %v2139
  %v2400 = vadd.f32 %v2399, %v2140
  %v2401 = vadd.f32 %v2400, %v2141
  %v2402 = vadd.f32 %v2401, %v2142
  %v2403 = vadd.f32 %v2402, %v2143
  %v2404 = vadd.f32 %v2403, %v2144
  %v2405 = vadd.f32 %v2404, %v2145
  %v2406 = vadd.f32 %v2405, %v2146
  %v2407 = vadd.f32 %v2406, %v2147
  %v2408 = vadd.f32 %v2407, %v2148
  %v2409 = vadd.f32 %v2408, %v2149
  %v2410 = vadd.f32 %v2409, %v2150
  %v2411 = vadd.f32 %v2410, %v2151
  %v2412 = vadd.f32 %v2411, %v2152
  %v2413 = vadd.f32 %v2412, %v2153
  %v2414 = vadd.f32 %v2413, %v2154
  %v2415 = vadd.f32 %v2414, %v2155
  %v2416 = vadd.f32 %v2415, %v2156
  %v2417 = vadd.f32 %v2416, %v2157
  %v2418 = vadd.f32 %v2417, %v2158
  %v2419 = vadd.f32 %v2418, %v2159
  %v2420 = vadd.f32 %v2419, %v2160
  %v2421 = vadd.f32 %v2420, %v2161
  %v2422 = vadd.f32 %v2421, %v2162
  %v2423 = vadd.f32 %v2422, %v2163
  %v2424 = vadd.f32 %v2423, %v2164
  %v2425 = vadd.f32 %v2424, %v2165
  %v2426 = vadd.f32 %v2425, %v2166
  %v2427 = vadd.f32 %v2426, %v2167
  %v2428 = vadd.f32 %v2427, %v2168
  %v2429 = vadd.f32 %v2428, %v2169
  %v2430 = vadd.f32 %v2429, %v2170
  %v2431 = vadd.f32 %v2430, %v2171
  %v2432 = vadd.f32 %v2431, %v2172
  %v2433 = vadd.f32 %v2432, %v2173
  %v2434 = vadd.f32 %v2433, %v2174
  %v2435 = vadd.f32 %v2434, %v2175
  %v2436 = vadd.f32 %v2435, %v2176
  %v2437 = vadd.f32 %v2436, %v2177
  %v2438 = vadd.f32 %v2437, %v2178
  %v2439 = vadd.f32 %v2438, %v2179
  %v2440 = vadd.f32 %v2439, %v2180
  %v2441 = vadd.f32 %v2440, %v2181
  %v2442 = vadd.f32 %v2441, %v2182
  %v2443 = vadd.f32 %v2442, %v2183
  %v2444 = vadd.f32 %v2443, %v2184
  %v2445 = vadd.f32 %v2444, %v2185
  %v2446 = vadd.f32 %v2445, %v2186
  %v2447 = vadd.f32 %v2446, %v2187
  %v2448 = vadd.f32 %v2447, %v2188
  %v2449 = vadd.f32 %v2448, %v2189
  %v2450 = vadd.f32 %v2449, %v2190
  %v2451 = vadd.f32 %v2450, %v2191
  %v2452 = vadd.f32 %v2451, %v2192
  %v2453 = vadd.f32 %v2452, %v2193
  %v2454 = vadd.f32 %v2453, %v2194
  %v2455 = vadd.f32 %v2454, %v2195
  %v2456 = vadd.f32 %v2455, %v2196
  %v2457 = vadd.f32 %v2456, %v2197
  %v2458 = vadd.f32 %v2457, %v2198
  %v2459 = vadd.f32 %v2458, %v2199
  %v2460 = vadd.f32 %v2459, %v2200
  %v2461 = vadd.f32 %v2460, %v2201
  %v2462 = vadd.f32 %v2461, %v2202
  %v2463 = vadd.f32 %v2462, %v2203
  %v2464 = vadd.f32 %v2463, %v2204
  %v2465 = vadd.f32 %v2464, %v2205
  %v2466 = vadd.f32 %v2465, %v2206
  %v2467 = vadd.f32 %v2466, %v2207
  %v2468 = vadd.f32 %v2467, %v2208
  %v2469 = vadd.f32 %v2468, %v2209
  %v2470 = vadd.f32 %v2469, %v2210
  %v2471 = vadd.f32 %v2470, %v2211
  %v2472 = vadd.f32 %v2471, %v2212
  %v2473 = vadd.f32 %v2472, %v2213
  %v2474 = vadd.f32 %v2473, %v2214
  %v2475 = vadd.f32 %v2474, %v2215
  %v2476 = vadd.f32 %v2475, %v2216
  %v2477 = vadd.f32 %v2476, %v2217
  %v2478 = vadd.f32 %v2477, %v2218
  %v2479 = vadd.f32 %v2478, %v2219
  %v2480 = vadd.f32 %v2479, %v2220
  %v2481 = vadd.f32 %v2480, %v2221
  %v2482 = vrot.slane %v2481, 4
  %v2483 = vadd.f32 %v2481, %v2482
  %v2484 = vrot.slane %v2483, 2
  %v2485 = vadd.f32 %v2483, %v2484
  %v2486 = vrot.slane %v2485, 1
  %v2487 = vadd.f32 %v2485, %v2486
  %v2488 = vrcp.pop 1024.0
  %v2489 = vmul.f32 1024.0, %v2488
  %v2490 = vsub.f32 1.0, %v2489
  %v2491 = vmul.f32 %v2488, %v2490
  %v2492 = vadd.f32 %v2488, %v2491
  %vm2493 = vweird.f32 %v2488
  %v2494 = vsel %vm2493, %v2488, %v2492
  %v2495 = vmul.f32 %v2354, %v2494
  %v2496 = vmul.f32 %v2487, %v2494
  %v2497 = vpack.c.bf16 %v2495, %v2495
  %v2498 = vpack.c.bf16 %v2496, %v2496
  %v2499 = vld [vmem:[%s2] sm:$0xff]
  %v2500 = vld [vmem:[%s2 + $0x8] sm:$0xff]
  %v2501 = vld [vmem:[%s2 + $0x10] sm:$0xff]
  %v2502 = vld [vmem:[%s2 + $0x18] sm:$0xff]
  %v2503 = vld [vmem:[%s2 + $0x20] sm:$0xff]
  %v2504 = vld [vmem:[%s2 + $0x28] sm:$0xff]
  %v2505 = vld [vmem:[%s2 + $0x30] sm:$0xff]
  %v2506 = vld [vmem:[%s2 + $0x38] sm:$0xff]
  %v2507 = vld [vmem:[%s2 + $0x40] sm:$0xff]
  %v2508 = vld [vmem:[%s2 + $0x48] sm:$0xff]
  %v2509 = vld [vmem:[%s2 + $0x50] sm:$0xff]
  %v2510 = vld [vmem:[%s2 + $0x58] sm:$0xff]
  %v2511 = vld [vmem:[%s2 + $0x60] sm:$0xff]
  %v2512 = vld [vmem:[%s2 + $0x68] sm:$0xff]
  %v2513 = vld [vmem:[%s2 + $0x70] sm:$0xff]
  %v2514 = vld [vmem:[%s2 + $0x78] sm:$0xff]
  %v2515 = vld [vmem:[%s2 + $0x80] sm:$0xff]
  %v2516 = vld [vmem:[%s2 + $0x88] sm:$0xff]
  %v2517 = vld [vmem:[%s2 + $0x90] sm:$0xff]
  %v2518 = vld [vmem:[%s2 + $0x98] sm:$0xff]
  %v2519 = vld [vmem:[%s2 + $0xa0] sm:$0xff]
  %v2520 = vld [vmem:[%s2 + $0xa8] sm:$0xff]
  %v2521 = vld [vmem:[%s2 + $0xb0] sm:$0xff]
  %v2522 = vld [vmem:[%s2 + $0xb8] sm:$0xff]
  %v2523 = vld [vmem:[%s2 + $0xc0] sm:$0xff]
  %v2524 = vld [vmem:[%s2 + $0xc8] sm:$0xff]
  %v2525 = vld [vmem:[%s2 + $0xd0] sm:$0xff]
  %v2526 = vld [vmem:[%s2 + $0xd8] sm:$0xff]
  %v2527 = vld [vmem:[%s2 + $0xe0] sm:$0xff]
  %v2528 = vld [vmem:[%s2 + $0xe8] sm:$0xff]
  %v2529 = vld [vmem:[%s2 + $0xf0] sm:$0xff]
  %v2530 = vld [vmem:[%s2 + $0xf8] sm:$0xff]
  %s2531 = scalar_lea.vmem %s3, 1
  %v2532 = vld [vmem:[%s2531] ss:$4 sm:$0xf]
  %v2534 = vperm.slane %v2532, 0
  %v2535 = vperm.slane %v2532, 1
  %v2536 = vperm.slane %v2532, 2
  %v2537 = vperm.slane %v2532, 3
  %v2544 = vunpack.c.l.b16 %v2497
  %v2545 = vunpack.c.l.b16 %v2498
  %vm2546 = vcmask 1041409
  %v2547 = vsel %vm2546, %v2545, %v2544
  %v2548 = vpack.c.b16 %v2547, %v2547
  %v2582 = vunpack.c.l.b16 %v2499
  %v2583 = vunpack.c.h.b16 %v2499
  %v2584 = vunpack.c.l.b16 %v2500
  %v2585 = vunpack.c.h.b16 %v2500
  %v2586 = vunpack.c.l.b16 %v2501
  %v2587 = vunpack.c.h.b16 %v2501
  %v2588 = vunpack.c.l.b16 %v2502
  %v2589 = vunpack.c.h.b16 %v2502
  %v2590 = vunpack.c.l.b16 %v2503
  %v2591 = vunpack.c.h.b16 %v2503
  %v2592 = vunpack.c.l.b16 %v2504
  %v2593 = vunpack.c.h.b16 %v2504
  %v2594 = vunpack.c.l.b16 %v2505
  %v2595 = vunpack.c.h.b16 %v2505
  %v2596 = vunpack.c.l.b16 %v2506
  %v2597 = vunpack.c.h.b16 %v2506
  %v2598 = vunpack.c.l.b16 %v2507
  %v2599 = vunpack.c.h.b16 %v2507
  %v2600 = vunpack.c.l.b16 %v2508
  %v2601 = vunpack.c.h.b16 %v2508
  %v2602 = vunpack.c.l.b16 %v2509
  %v2603 = vunpack.c.h.b16 %v2509
  %v2604 = vunpack.c.l.b16 %v2510
  %v2605 = vunpack.c.h.b16 %v2510
  %v2606 = vunpack.c.l.b16 %v2511
  %v2607 = vunpack.c.h.b16 %v2511
  %v2608 = vunpack.c.l.b16 %v2512
  %v2609 = vunpack.c.h.b16 %v2512
  %v2610 = vunpack.c.l.b16 %v2513
  %v2611 = vunpack.c.h.b16 %v2513
  %v2612 = vunpack.c.l.b16 %v2514
  %v2613 = vunpack.c.h.b16 %v2514
  %v2614 = vunpack.c.l.b16 %v2515
  %v2615 = vunpack.c.h.b16 %v2515
  %v2616 = vunpack.c.l.b16 %v2516
  %v2617 = vunpack.c.h.b16 %v2516
  %v2618 = vunpack.c.l.b16 %v2517
  %v2619 = vunpack.c.h.b16 %v2517
  %v2620 = vunpack.c.l.b16 %v2518
  %v2621 = vunpack.c.h.b16 %v2518
  %v2622 = vunpack.c.l.b16 %v2519
  %v2623 = vunpack.c.h.b16 %v2519
  %v2624 = vunpack.c.l.b16 %v2520
  %v2625 = vunpack.c.h.b16 %v2520
  %v2626 = vunpack.c.l.b16 %v2521
  %v2627 = vunpack.c.h.b16 %v2521
  %v2628 = vunpack.c.l.b16 %v2522
  %v2629 = vunpack.c.h.b16 %v2522
  %v2630 = vunpack.c.l.b16 %v2523
  %v2631 = vunpack.c.h.b16 %v2523
  %v2632 = vunpack.c.l.b16 %v2524
  %v2633 = vunpack.c.h.b16 %v2524
  %v2634 = vunpack.c.l.b16 %v2525
  %v2635 = vunpack.c.h.b16 %v2525
  %v2636 = vunpack.c.l.b16 %v2526
  %v2637 = vunpack.c.h.b16 %v2526
  %v2638 = vunpack.c.l.b16 %v2527
  %v2639 = vunpack.c.h.b16 %v2527
  %v2640 = vunpack.c.l.b16 %v2528
  %v2641 = vunpack.c.h.b16 %v2528
  %v2642 = vunpack.c.l.b16 %v2529
  %v2643 = vunpack.c.h.b16 %v2529
  %v2644 = vunpack.c.l.b16 %v2530
  %v2645 = vunpack.c.h.b16 %v2530
  %v2646 = vpack.c.b16 %v2586, %v2582
  %v2647 = vpack.c.b16 %v2587, %v2583
  %v2648 = vpack.c.b16 %v2588, %v2584
  %v2649 = vpack.c.b16 %v2589, %v2585
  %v2650 = vpack.c.b16 %v2594, %v2590
  %v2651 = vpack.c.b16 %v2595, %v2591
  %v2652 = vpack.c.b16 %v2596, %v2592
  %v2653 = vpack.c.b16 %v2597, %v2593
  %v2654 = vpack.c.b16 %v2602, %v2598
  %v2655 = vpack.c.b16 %v2603, %v2599
  %v2656 = vpack.c.b16 %v2604, %v2600
  %v2657 = vpack.c.b16 %v2605, %v2601
  %v2658 = vpack.c.b16 %v2610, %v2606
  %v2659 = vpack.c.b16 %v2611, %v2607
  %v2660 = vpack.c.b16 %v2612, %v2608
  %v2661 = vpack.c.b16 %v2613, %v2609
  %v2662 = vpack.c.b16 %v2618, %v2614
  %v2663 = vpack.c.b16 %v2619, %v2615
  %v2664 = vpack.c.b16 %v2620, %v2616
  %v2665 = vpack.c.b16 %v2621, %v2617
  %v2666 = vpack.c.b16 %v2626, %v2622
  %v2667 = vpack.c.b16 %v2627, %v2623
  %v2668 = vpack.c.b16 %v2628, %v2624
  %v2669 = vpack.c.b16 %v2629, %v2625
  %v2670 = vpack.c.b16 %v2634, %v2630
  %v2671 = vpack.c.b16 %v2635, %v2631
  %v2672 = vpack.c.b16 %v2636, %v2632
  %v2673 = vpack.c.b16 %v2637, %v2633
  %v2674 = vpack.c.b16 %v2642, %v2638
  %v2675 = vpack.c.b16 %v2643, %v2639
  %v2676 = vpack.c.b16 %v2644, %v2640
  %v2677 = vpack.c.b16 %v2645, %v2641
  %2710 = vmatpush.bf16.msra.mxu0 %v2674
  %2711 = vmatpush.bf16.msra.mxu0 %v2670
  %2712 = vmatpush.bf16.msra.mxu0 %v2666
  %2713 = vmatpush.bf16.msra.mxu0 %v2662
  %2714 = vmatpush.bf16.msra.mxu0 %v2658
  %2715 = vmatpush.bf16.msra.mxu0 %v2654
  %2716 = vmatpush.bf16.msra.mxu0 %v2650
  %2717 = vmatpush.bf16.msra.mxu0 %v2646
  %2718 = vmatmul.bf16.gmra.mxu0 %v2548
  %v2719 = vpop.f32.mrf.mxu0
  %v2720 = vadd.f32 %v2534, %v2719
  %v2721 = vpop.f32.mrf.mxu0
  %2722 = vdwg.mxu0
  %2723 = vmatpush.bf16.msra.mxu0 %v2675
  %2724 = vmatpush.bf16.msra.mxu0 %v2671
  %2725 = vmatpush.bf16.msra.mxu0 %v2667
  %2726 = vmatpush.bf16.msra.mxu0 %v2663
  %2727 = vmatpush.bf16.msra.mxu0 %v2659
  %2728 = vmatpush.bf16.msra.mxu0 %v2655
  %2729 = vmatpush.bf16.msra.mxu0 %v2651
  %2730 = vmatpush.bf16.msra.mxu0 %v2647
  %2731 = vmatmul.bf16.gmra.mxu0 %v2548
  %v2732 = vpop.f32.mrf.mxu0
  %v2733 = vadd.f32 %v2535, %v2732
  %v2734 = vpop.f32.mrf.mxu0
  %2735 = vdwg.mxu0
  %2736 = vmatpush.bf16.msra.mxu0 %v2676
  %2737 = vmatpush.bf16.msra.mxu0 %v2672
  %2738 = vmatpush.bf16.msra.mxu0 %v2668
  %2739 = vmatpush.bf16.msra.mxu0 %v2664
  %2740 = vmatpush.bf16.msra.mxu0 %v2660
  %2741 = vmatpush.bf16.msra.mxu0 %v2656
  %2742 = vmatpush.bf16.msra.mxu0 %v2652
  %2743 = vmatpush.bf16.msra.mxu0 %v2648
  %2744 = vmatmul.bf16.gmra.mxu0 %v2548
  %v2745 = vpop.f32.mrf.mxu0
  %v2746 = vadd.f32 %v2536, %v2745
  %v2747 = vpop.f32.mrf.mxu0
  %2748 = vdwg.mxu0
  %2749 = vmatpush.bf16.msra.mxu0 %v2677
  %2750 = vmatpush.bf16.msra.mxu0 %v2673
  %2751 = vmatpush.bf16.msra.mxu0 %v2669
  %2752 = vmatpush.bf16.msra.mxu0 %v2665
  %2753 = vmatpush.bf16.msra.mxu0 %v2661
  %2754 = vmatpush.bf16.msra.mxu0 %v2657
  %2755 = vmatpush.bf16.msra.mxu0 %v2653
  %2756 = vmatpush.bf16.msra.mxu0 %v2649
  %2757 = vmatmul.bf16.gmra.mxu0 %v2548
  %v2758 = vpop.f32.mrf.mxu0
  %v2759 = vadd.f32 %v2537, %v2758
  %v2760 = vpop.f32.mrf.mxu0
  %2761 = vdwg.mxu0
  %v2762 = vmax.f32 %v2720, 0.0
  %v2763 = vmax.f32 %v2733, 0.0
  %v2764 = vmax.f32 %v2746, 0.0
  %v2765 = vmax.f32 %v2759, 0.0
  %s2766 = scalar_lea.vmem %s3, 2
  %v2767 = vld [vmem:[%s2766] ss:$4 sm:$0xf]
  %v2769 = vperm.slane %v2767, 0
  %v2770 = vperm.slane %v2767, 1
  %v2771 = vperm.slane %v2767, 2
  %v2772 = vperm.slane %v2767, 3
  %v2777 = vmul.f32 %v2762, %v2769
  %v2778 = vmul.f32 %v2763, %v2770
  %v2779 = vmul.f32 %v2764, %v2771
  %v2780 = vmul.f32 %v2765, %v2772
  %vm2781 = vcmask 1041408
  %v2782 = vsel %vm2781, %v2777, 0.0
  %v2783 = vsel %vm2781, %v2778, 0.0
  %v2784 = vadd.f32 %v2782, %v2783
  %v2785 = vsel %vm2781, %v2779, 0.0
  %v2786 = vadd.f32 %v2784, %v2785
  %v2787 = vsel %vm2781, %v2780, 0.0
  %v2788 = vadd.f32 %v2786, %v2787
  %2789 = vadd.xlane.f32.xlu0 %v2788
  %v2790 = vpop.xlane.xlu0 %2789
  %v2791 = vld [vmem:[%s3 + $0x3] sm:$0x1]
  %v2792 = vperm.slane %v2791, 0
  %v2793 = vadd.f32 %v2790, %v2792
  %vm2794 = vcmask 1024
  %2795 = vst.msk [vmem:[%s4] sm:$0x3] %vm2794, %v2793
  // Predicated region
  $region18: #{_forward_impl.1} parent=0 // pred_check
    _
  $region19: #{_forward_impl.1} parent=0 // pred_check_branch
    %2797 = sbr.rel (0) target = $region21
  $region20: #{_forward_impl.1} parent=0 // pred_region
    _
  $region21: #{_forward_impl.1} parent=0 // pred_fallthru
    _
  // Predicated region
  $region22: #{_forward_impl.1} parent=0 // pred_check
    _
  $region23: #{_forward_impl.1} parent=0 // pred_check_branch
    %2799 = sbr.rel (0) target = $region25
  $region24: #{_forward_impl.1} parent=0 // pred_region
    _
  $region25: #{_forward_impl.1} parent=0 // pred_fallthru
    _

</llo_original>
